<compile_context>
chip_gen: v5e
topology: v5e:2x2
jax: 0.10.0
libtpu: 0.0.40
codegen_flags: <defaults>
</compile_context>

<pallas_src>
import numpy as np
import jax
import jax.numpy as jnp
from jax import lax
from jax.experimental import pallas as pl
from jax.experimental.pallas import tpu as pltpu

IN_DIM = 6
HID_DIM = 10
LAYERS = 20
OUT_STATE = 2


# ----------------------------------------------------------------------------
# Pallas kernel: wavefront 20-layer LSTM recurrence + ReLU + Linear + Sigmoid.
# ----------------------------------------------------------------------------
def lstm_kernel(x_ref, wih_ref, whh_ref, b_ref, wout_ref, bout_ref, out_ref):
    # x_ref   : (T, B, H)      time-major, layer-0 features zero-padded D_in -> H
    # wih_ref : (L, H, 4H)     fused input->hidden weights (W_ih.T), gates (i,f,o,g)
    # whh_ref : (L, H, 4H)     fused hidden->hidden weights (W_hh.T), gates (i,f,o,g)
    # b_ref   : (L, 1, 4H)     b_ih + b_hh, gates (i,f,o,g)
    # wout_ref: (H, OUT)       head weight (already W.T)
    # bout_ref: (1, OUT)
    # out_ref : (B, OUT)
    T, B, H = x_ref.shape
    L, _, G = wih_ref.shape            # G == 4*H

    # Hoist loop-invariant loads / broadcasts out of the wavefront loop.
    wih = wih_ref[...]                                     # (L, H, 4H)
    whh = whh_ref[...]                                     # (L, H, 4H)
    bias = jnp.broadcast_to(b_ref[...], (L, B, G))         # (L, B, 4H)
    l_idx = lax.broadcasted_iota(jnp.int32, (L, B, H), 0)  # layer index per element

    h0 = jnp.zeros((L, B, H), jnp.float32)
    c0 = jnp.zeros((L, B, H), jnp.float32)

    # Wavefront k processes every cell (layer l, time t) with l + t == k.
    # All cells of a wavefront are independent -> their matmuls / EUP ops
    # pipeline; the serial chain is only L + T - 1 steps.
    def wave_body(k, carry):
        h_state, c_state = carry       # (L, B, H): layer l's h/c after time (k-1-l)

        # Layer-0 input for this wavefront (clamped read; masked out when k >= T).
        x_k = x_ref[jnp.minimum(k, T - 1)]                         # (B, H)
        # Input to layer l is layer (l-1)'s output from the previous wavefront.
        inputs = jnp.concatenate([x_k[None], h_state[:L - 1]], axis=0)   # (L, B, H)

        z = (jnp.einsum('lbh,lhg->lbg', inputs, wih,
                        preferred_element_type=jnp.float32)
             + jnp.einsum('lbh,lhg->lbg', h_state, whh,
                          preferred_element_type=jnp.float32)
             + bias)                                               # (L, B, 4H)

        sig = jax.nn.sigmoid(z[:, :, :3 * H])                      # i, f, o gates
        i_g = sig[:, :, 0:H]
        f_g = sig[:, :, H:2 * H]
        o_g = sig[:, :, 2 * H:3 * H]
        g_g = jnp.tanh(z[:, :, 3 * H:])                            # g gate

        c_new = f_g * c_state + i_g * g_g
        h_new = o_g * jnp.tanh(c_new)

        # Only cells with 0 <= t < T (t = k - l) actually advance their state.
        t_l = k - l_idx
        active = jnp.logical_and(t_l >= 0, t_l < T)
        return (jnp.where(active, h_new, h_state),
                jnp.where(active, c_new, c_state))

    h_state, _ = lax.fori_loop(0, L + T - 1, wave_body, (h0, c0))

    # relu(rout)[:, -1, :] -> Linear -> sigmoid  (top layer, last timestep)
    h_last = h_state[L - 1]                                        # (B, H)
    re = jnp.maximum(h_last, 0.0)
    logits = (jnp.dot(re, wout_ref[...], preferred_element_type=jnp.float32)
              + bout_ref[...])
    out_ref[...] = jax.nn.sigmoid(logits).astype(out_ref.dtype)


def lstm_forward(x, kernel_params):
    wih, whh, b, wout, bout = kernel_params
    B, T, D = x.shape
    H = HID_DIM
    # Pad layer-0 input features D_in -> H with zeros and go time-major.
    x_pad = jnp.zeros((B, T, H), jnp.float32).at[:, :, :D].set(x.astype(jnp.float32))
    x_tm = jnp.transpose(x_pad, (1, 0, 2))  # (T, B, H)

    out = pl.pallas_call(
        lstm_kernel,
        out_shape=jax.ShapeDtypeStruct((B, OUT_STATE), jnp.float32),
        in_specs=[pl.BlockSpec(memory_space=pltpu.MemorySpace.VMEM)] * 6,
        out_specs=pl.BlockSpec(memory_space=pltpu.MemorySpace.VMEM),
    )(x_tm, wih, whh, b, wout, bout)
    return out


# ----------------------------------------------------------------------------
# Deterministic parameter init (PyTorch layout) + conversion to kernel layout.
# ----------------------------------------------------------------------------
def init_params_pt(key):
    keys = jax.random.split(key, 4 * LAYERS + 2)
    scale = 1.0 / np.sqrt(HID_DIM)
    idx = 0
    layers = []
    for l in range(LAYERS):
        in_sz = IN_DIM if l == 0 else HID_DIM
        w_ih = jax.random.uniform(keys[idx], (4 * HID_DIM, in_sz), jnp.float32, -scale, scale); idx += 1
        w_hh = jax.random.uniform(keys[idx], (4 * HID_DIM, HID_DIM), jnp.float32, -scale, scale); idx += 1
        b_ih = jax.random.uniform(keys[idx], (4 * HID_DIM,), jnp.float32, -scale, scale); idx += 1
        b_hh = jax.random.uniform(keys[idx], (4 * HID_DIM,), jnp.float32, -scale, scale); idx += 1
        layers.append((w_ih, w_hh, b_ih, b_hh))
    w_out = jax.random.uniform(keys[idx], (OUT_STATE, HID_DIM), jnp.float32, -scale, scale); idx += 1
    b_out = jax.random.uniform(keys[idx], (OUT_STATE,), jnp.float32, -scale, scale)
    return layers, (w_out, b_out)


def to_kernel_params(pt_layers, pt_head):
    H = HID_DIM
    G = 4 * H
    # Kernel gate order (i, f, o, g); PyTorch rows are (i, f, g, o).
    perm = (0, 1, 3, 2)
    wih_k = np.zeros((LAYERS, H, G), np.float32)   # layer-0 padded on input dim
    whh_k = np.zeros((LAYERS, H, G), np.float32)
    b_k = np.zeros((LAYERS, 1, G), np.float32)
    for l, (w_ih, w_hh, b_ih, b_hh) in enumerate(pt_layers):
        w_ih = np.asarray(w_ih); w_hh = np.asarray(w_hh)
        b = np.asarray(b_ih) + np.asarray(b_hh)
        in_sz = w_ih.shape[1]
        for gk, gp in enumerate(perm):
            wih_k[l, :in_sz, gk * H:(gk + 1) * H] = w_ih[gp * H:(gp + 1) * H, :].T
            whh_k[l, :, gk * H:(gk + 1) * H] = w_hh[gp * H:(gp + 1) * H, :].T
            b_k[l, 0, gk * H:(gk + 1) * H] = b[gp * H:(gp + 1) * H]
    w_out, b_out = pt_head
    wout_k = np.asarray(w_out).T                       # (H, OUT_STATE)
    bout_k = np.asarray(b_out).reshape(1, -1)
    return (jnp.asarray(wih_k), jnp.asarray(whh_k), jnp.asarray(b_k),
            jnp.asarray(wout_k), jnp.asarray(bout_k))


# ----------------------------------------------------------------------------
# Pure NumPy reference (PyTorch nn.LSTM semantics) for verification.
# ----------------------------------------------------------------------------
def _sigmoid(x):
    return 1.0 / (1.0 + np.exp(-x))


def ref_forward(x, pt_layers, pt_head):
    x = np.asarray(x, np.float32)
    B, T, _ = x.shape
    H = HID_DIM
    seq = x
    for (w_ih, w_hh, b_ih, b_hh) in pt_layers:
        w_ih = np.asarray(w_ih); w_hh = np.asarray(w_hh)
        b_ih = np.asarray(b_ih); b_hh = np.asarray(b_hh)
        h = np.zeros((B, H), np.float32)
        c = np.zeros((B, H), np.float32)
        outs = []
        for t in range(T):
            z = seq[:, t, :] @ w_ih.T + b_ih + h @ w_hh.T + b_hh
            i = _sigmoid(z[:, 0:H]); f = _sigmoid(z[:, H:2 * H])
            g = np.tanh(z[:, 2 * H:3 * H]); o = _sigmoid(z[:, 3 * H:4 * H])
            c = f * c + i * g
            h = o * np.tanh(c)
            outs.append(h)
        seq = np.stack(outs, axis=1)
    re = np.maximum(seq, 0.0)
    w_out, b_out = pt_head
    logits = re[:, -1, :] @ np.asarray(w_out).T + np.asarray(b_out)
    return _sigmoid(logits)


if __name__ == "__main__":
    key = jax.random.PRNGKey(0)
    k_x, k_p = jax.random.split(key)
    B, T = 2, 8
    x = jax.random.normal(k_x, (B, T, IN_DIM), jnp.float32)

    pt_layers, pt_head = init_params_pt(k_p)
    kernel_params = to_kernel_params(pt_layers, pt_head)

    out = lstm_forward(x, kernel_params)
    out = jax.block_until_ready(out)

    ref = ref_forward(x, pt_layers, pt_head)
    np.testing.assert_allclose(np.asarray(out), ref, rtol=1e-3, atol=1e-3)

    print("KERNEL_OK")
</pallas_src>

<mosaic_0001>
module attributes {stable_mosaic.version = 11 : i64} {
  func.func @lstm_kernel(%arg0: memref<8x2x10xf32, #tpu.memory_space<vmem>>, %arg1: memref<20x10x40xf32, #tpu.memory_space<vmem>>, %arg2: memref<20x10x40xf32, #tpu.memory_space<vmem>>, %arg3: memref<20x1x40xf32, #tpu.memory_space<vmem>>, %arg4: memref<10x2xf32, #tpu.memory_space<vmem>>, %arg5: memref<1x2xf32, #tpu.memory_space<vmem>>, %arg6: memref<2x2xf32, #tpu.memory_space<vmem>>) attributes {dimension_semantics = [], scalar_prefetch = 0 : i64, scratch_operands = 0 : i64, tpu.core_type = #tpu.core_type<tc>} {
    %c0 = arith.constant 0 : index
    %c0_0 = arith.constant 0 : index
    %c0_1 = arith.constant 0 : index
    %0 = vector.load %arg1[%c0, %c0_0, %c0_1] : memref<20x10x40xf32, #tpu.memory_space<vmem>>, vector<20x10x40xf32>
    %c0_2 = arith.constant 0 : index
    %c0_3 = arith.constant 0 : index
    %c0_4 = arith.constant 0 : index
    %1 = vector.load %arg2[%c0_2, %c0_3, %c0_4] : memref<20x10x40xf32, #tpu.memory_space<vmem>>, vector<20x10x40xf32>
    %c0_5 = arith.constant 0 : index
    %c0_6 = arith.constant 0 : index
    %c0_7 = arith.constant 0 : index
    %2 = vector.load %arg3[%c0_5, %c0_6, %c0_7] : memref<20x1x40xf32, #tpu.memory_space<vmem>>, vector<20x1x40xf32>
    %3 = vector.shape_cast %2 : vector<20x1x40xf32> to vector<20x1x40xf32>
    %4 = vector.broadcast %3 : vector<20x1x40xf32> to vector<20x2x40xf32>
    %5 = tpu.iota {dimensions = array<i32: 0>} : vector<20x2x10xi32>
    %cst = arith.constant 0.000000e+00 : f32
    %6 = vector.broadcast %cst : f32 to vector<20x2x10xf32>
    %cst_8 = arith.constant 0.000000e+00 : f32
    %7 = vector.broadcast %cst_8 : f32 to vector<20x2x10xf32>
    %c0_i32 = arith.constant 0 : i32
    %c27_i32 = arith.constant 27 : i32
    %8 = arith.addi %c0_i32, %c27_i32 : i32
    %c1_i32 = arith.constant 1 : i32
    %9:2 = scf.for %arg7 = %c0_i32 to %8 step %c1_i32 iter_args(%arg8 = %6, %arg9 = %7) -> (vector<20x2x10xf32>, vector<20x2x10xf32>)  : i32 {
      %c7_i32 = arith.constant 7 : i32
      %25 = arith.minsi %arg7, %c7_i32 : i32
      %26 = arith.index_cast %25 : i32 to index
      %c0_19 = arith.constant 0 : index
      %c0_20 = arith.constant 0 : index
      %27 = vector.load %arg0[%26, %c0_19, %c0_20] : memref<8x2x10xf32, #tpu.memory_space<vmem>>, vector<1x2x10xf32>
      %28 = vector.shape_cast %27 : vector<1x2x10xf32> to vector<2x10xf32>
      %29 = vector.shape_cast %28 : vector<2x10xf32> to vector<1x2x10xf32>
      %30 = vector.extract_strided_slice %arg8 {offsets = [0, 0, 0], sizes = [19, 2, 10], strides = [1, 1, 1]} : vector<20x2x10xf32> to vector<19x2x10xf32>
      %31 = tpu.concatenate %29, %30 in 0 : vector<1x2x10xf32>, vector<19x2x10xf32> -> vector<20x2x10xf32>
      "tpu.trace_start"() <{level = 10 : i32, message = "lbh,lhg->lbg"}> : () -> ()
      %cst_21 = arith.constant dense<0.000000e+00> : vector<20x2x40xf32>
      %32 = tpu.matmul %31, %0, %cst_21 {dimension_numbers = #tpu.dot_dimension_numbers<[2], [1], [1], [2], [0, 0, 0, 1, 1, 2], [0], [0]>} : vector<20x2x10xf32>, vector<20x10x40xf32>, vector<20x2x40xf32> -> vector<20x2x40xf32>
      %cst_22 = arith.constant dense<0.000000e+00> : vector<20x2x40xf32>
      %33 = tpu.matmul %arg8, %1, %cst_22 {dimension_numbers = #tpu.dot_dimension_numbers<[2], [1], [1], [2], [0, 0, 0, 1, 1, 2], [0], [0]>} : vector<20x2x10xf32>, vector<20x10x40xf32>, vector<20x2x40xf32> -> vector<20x2x40xf32>
      "tpu.trace_stop"() : () -> ()
      %34 = arith.addf %32, %33 : vector<20x2x40xf32>
      %35 = arith.addf %34, %4 : vector<20x2x40xf32>
      %36 = vector.extract_strided_slice %35 {offsets = [0, 0, 0], sizes = [20, 2, 30], strides = [1, 1, 1]} : vector<20x2x40xf32> to vector<20x2x30xf32>
      %37 = arith.negf %36 : vector<20x2x30xf32>
      %38 = math.exp %37 : vector<20x2x30xf32>
      %cst_23 = arith.constant 1.000000e+00 : f32
      %39 = vector.broadcast %cst_23 : f32 to vector<20x2x30xf32>
      %40 = arith.addf %39, %38 : vector<20x2x30xf32>
      %41 = arith.divf %39, %40 : vector<20x2x30xf32>
      %42 = vector.extract_strided_slice %41 {offsets = [0, 0, 0], sizes = [20, 2, 10], strides = [1, 1, 1]} : vector<20x2x30xf32> to vector<20x2x10xf32>
      %43 = vector.extract_strided_slice %41 {offsets = [0, 0, 10], sizes = [20, 2, 10], strides = [1, 1, 1]} : vector<20x2x30xf32> to vector<20x2x10xf32>
      %44 = vector.extract_strided_slice %41 {offsets = [0, 0, 20], sizes = [20, 2, 10], strides = [1, 1, 1]} : vector<20x2x30xf32> to vector<20x2x10xf32>
      %45 = vector.extract_strided_slice %35 {offsets = [0, 0, 30], sizes = [20, 2, 10], strides = [1, 1, 1]} : vector<20x2x40xf32> to vector<20x2x10xf32>
      %46 = math.tanh %45 : vector<20x2x10xf32>
      %47 = arith.mulf %43, %arg9 : vector<20x2x10xf32>
      %48 = arith.mulf %42, %46 : vector<20x2x10xf32>
      %49 = arith.addf %47, %48 : vector<20x2x10xf32>
      %50 = math.tanh %49 : vector<20x2x10xf32>
      %51 = arith.mulf %44, %50 : vector<20x2x10xf32>
      %52 = vector.broadcast %arg7 : i32 to vector<20x2x10xi32>
      %53 = arith.subi %52, %5 : vector<20x2x10xi32>
      %c0_i32_24 = arith.constant 0 : i32
      %54 = vector.broadcast %c0_i32_24 : i32 to vector<20x2x10xi32>
      %55 = arith.cmpi sge, %53, %54 : vector<20x2x10xi32>
      %c8_i32 = arith.constant 8 : i32
      %56 = vector.broadcast %c8_i32 : i32 to vector<20x2x10xi32>
      %57 = arith.cmpi slt, %53, %56 : vector<20x2x10xi32>
      %58 = arith.andi %55, %57 : vector<20x2x10xi1>
      %59 = arith.select %58, %51, %arg8 : vector<20x2x10xi1>, vector<20x2x10xf32>
      %60 = arith.select %58, %49, %arg9 : vector<20x2x10xi1>, vector<20x2x10xf32>
      scf.yield %59, %60 : vector<20x2x10xf32>, vector<20x2x10xf32>
    }
    %c27_i32_9 = arith.constant 27 : i32
    %10 = vector.extract_strided_slice %9#0 {offsets = [19, 0, 0], sizes = [1, 2, 10], strides = [1, 1, 1]} : vector<20x2x10xf32> to vector<1x2x10xf32>
    %11 = vector.shape_cast %10 : vector<1x2x10xf32> to vector<2x10xf32>
    %cst_10 = arith.constant 0.000000e+00 : f32
    %12 = vector.broadcast %cst_10 : f32 to vector<2x10xf32>
    %13 = arith.maximumf %11, %12 : vector<2x10xf32>
    %c0_11 = arith.constant 0 : index
    %c0_12 = arith.constant 0 : index
    %14 = vector.load %arg4[%c0_11, %c0_12] : memref<10x2xf32, #tpu.memory_space<vmem>>, vector<10x2xf32>
    %cst_13 = arith.constant dense<0.000000e+00> : vector<2x2xf32>
    %15 = tpu.matmul %13, %14, %cst_13 {dimension_numbers = #tpu.dot_dimension_numbers<[1], [0], [0], [1], [0, 0, 1, 1], [], []>} : vector<2x10xf32>, vector<10x2xf32>, vector<2x2xf32> -> vector<2x2xf32>
    %c0_14 = arith.constant 0 : index
    %c0_15 = arith.constant 0 : index
    %16 = vector.load %arg5[%c0_14, %c0_15] : memref<1x2xf32, #tpu.memory_space<vmem>>, vector<1x2xf32>
    %17 = vector.broadcast %16 : vector<1x2xf32> to vector<2x2xf32>
    %18 = arith.addf %15, %17 : vector<2x2xf32>
    %19 = arith.negf %18 : vector<2x2xf32>
    %20 = math.exp %19 : vector<2x2xf32>
    %cst_16 = arith.constant 1.000000e+00 : f32
    %21 = vector.broadcast %cst_16 : f32 to vector<2x2xf32>
    %22 = arith.addf %21, %20 : vector<2x2xf32>
    %23 = arith.divf %21, %22 : vector<2x2xf32>
    %c0_17 = arith.constant 0 : index
    %c0_18 = arith.constant 0 : index
    %24 = vector.load %arg6[%c0_17, %c0_18] : memref<2x2xf32, #tpu.memory_space<vmem>>, vector<2x2xf32>
    tpu.vector_store %arg6[%c0_17, %c0_18], %23 {strides = array<i32>} : memref<2x2xf32, #tpu.memory_space<vmem>>, vector<2x2xf32>,
    return
  }
}

</mosaic_0001>

<llo_original>
// kernel: tpu_custom_call.1
$region0: #{tpu_custom_call.1}
  #allocation0 [shape = 'u32[]', space=smem, size = 0x4, offset = 0x4, fixed_abs, tag = 'smem constant byte address 0x4 - core index']
  #allocation1 [shape = 'u32[72,128]{1,0:T(1,128)}', space=vmem, size = 0x9000, scoped, tag = 'internal scratch']
  %s0 = inlined_call_operand.vmem [shape: f32[8,2,10], index: 0, kind: input, shape index: {}]
  %s1 = inlined_call_operand.vmem [shape: f32[20,10,40], index: 1, kind: input, shape index: {}]
  %s2 = inlined_call_operand.vmem [shape: f32[20,10,40], index: 2, kind: input, shape index: {}]
  %s3 = inlined_call_operand.vmem [shape: f32[20,1,40], index: 3, kind: input, shape index: {}]
  %s4 = inlined_call_operand.vmem [shape: f32[10,2], index: 4, kind: input, shape index: {}]
  %s5 = inlined_call_operand.vmem [shape: f32[1,2], index: 5, kind: input, shape index: {}]
  %s6 = inlined_call_operand.hbm [shape: f32[2,2], index: 6, kind: output, shape index: {}]
  %s7 = sld [smem:[#allocation0]]
  $region41: #{tpu_custom_call.1} parent=0
    _
  %s9 = ssub.s32 1, %s7
  %s10 = scalar_select 0, %s9, %s7
  $region1: #{tpu_custom_call.1} parent=0
    #allocation2 [shape = 'u8[1024]{0}', space=vmem, size = 0x400, scoped, tag = 'output window, operand 0, single buffered']
    #allocation3 [shape = 's32[1]{0}', space=sflag, size = 0x4, scoped, tag = 'scoped memory for tpu_custom_call.1']
    %11 = vsyncpa [#allocation3], 0
    // Predicated region
    $region2: #{tpu_custom_call.1} parent=1 // pred_check
      _
    $region3: #{tpu_custom_call.1} parent=1 // pred_check_branch
      %13 = sbr.rel (0) target = $region5
    $region4: #{tpu_custom_call.1} parent=1 // pred_region
      _
    $region5: #{tpu_custom_call.1} parent=1 // pred_fallthru
      _
    // Predicated region
    $region6: #{tpu_custom_call.1} parent=1 // pred_check
      _
    $region7: #{tpu_custom_call.1} parent=1 // pred_check_branch
      %15 = sbr.rel (0) target = $region9
    $region8: #{tpu_custom_call.1} parent=1 // pred_region
      _
    $region9: #{tpu_custom_call.1} parent=1 // pred_fallthru
      _
    // Predicated region
    $region10: #{tpu_custom_call.1} parent=1 // pred_check
      _
    $region11: #{tpu_custom_call.1} parent=1 // pred_check_branch
      %17 = sbr.rel (0) target = $region13
    $region12: #{tpu_custom_call.1} parent=1 // pred_region
      _
    $region13: #{tpu_custom_call.1} parent=1 // pred_fallthru
      _
    // Predicated region
    $region14: #{tpu_custom_call.1} parent=1 // pred_check
      _
    $region15: #{tpu_custom_call.1} parent=1 // pred_check_branch
      %19 = sbr.rel (0) target = $region17
    $region16: #{tpu_custom_call.1} parent=1 // pred_region
      _
    $region17: #{tpu_custom_call.1} parent=1 // pred_fallthru
      _
    // Predicated region
    $region18: #{tpu_custom_call.1} parent=1 // pred_check
      _
    $region19: #{tpu_custom_call.1} parent=1 // pred_check_branch
      %21 = sbr.rel (0) target = $region21
    $region20: #{tpu_custom_call.1} parent=1 // pred_region
      _
    $region21: #{tpu_custom_call.1} parent=1 // pred_fallthru
      _
    // Predicated region
    $region22: #{tpu_custom_call.1} parent=1 // pred_check
      _
    $region23: #{tpu_custom_call.1} parent=1 // pred_check_branch
      %23 = sbr.rel (0) target = $region25
    $region24: #{tpu_custom_call.1} parent=1 // pred_region
      _
    $region25: #{tpu_custom_call.1} parent=1 // pred_fallthru
      _
    %v24 = vld [vmem:[%s1] sm:$0xff]
    %v25 = vld [vmem:[%s1 + $0x8] sm:$0x3]
    %v26 = vld [vmem:[%s1 + $0x10] sm:$0xff]
    %v27 = vld [vmem:[%s1 + $0x18] sm:$0x3]
    %v28 = vld [vmem:[%s1 + $0x20] sm:$0xff]
    %v29 = vld [vmem:[%s1 + $0x28] sm:$0x3]
    %v30 = vld [vmem:[%s1 + $0x30] sm:$0xff]
    %v31 = vld [vmem:[%s1 + $0x38] sm:$0x3]
    %v32 = vld [vmem:[%s1 + $0x40] sm:$0xff]
    %v33 = vld [vmem:[%s1 + $0x48] sm:$0x3]
    %v34 = vld [vmem:[%s1 + $0x50] sm:$0xff]
    %v35 = vld [vmem:[%s1 + $0x58] sm:$0x3]
    %v36 = vld [vmem:[%s1 + $0x60] sm:$0xff]
    %v37 = vld [vmem:[%s1 + $0x68] sm:$0x3]
    %v38 = vld [vmem:[%s1 + $0x70] sm:$0xff]
    %v39 = vld [vmem:[%s1 + $0x78] sm:$0x3]
    %v40 = vld [vmem:[%s1 + $0x80] sm:$0xff]
    %v41 = vld [vmem:[%s1 + $0x88] sm:$0x3]
    %v42 = vld [vmem:[%s1 + $0x90] sm:$0xff]
    %v43 = vld [vmem:[%s1 + $0x98] sm:$0x3]
    %v44 = vld [vmem:[%s1 + $0xa0] sm:$0xff]
    %v45 = vld [vmem:[%s1 + $0xa8] sm:$0x3]
    %v46 = vld [vmem:[%s1 + $0xb0] sm:$0xff]
    %v47 = vld [vmem:[%s1 + $0xb8] sm:$0x3]
    %v48 = vld [vmem:[%s1 + $0xc0] sm:$0xff]
    %v49 = vld [vmem:[%s1 + $0xc8] sm:$0x3]
    %v50 = vld [vmem:[%s1 + $0xd0] sm:$0xff]
    %v51 = vld [vmem:[%s1 + $0xd8] sm:$0x3]
    %v52 = vld [vmem:[%s1 + $0xe0] sm:$0xff]
    %v53 = vld [vmem:[%s1 + $0xe8] sm:$0x3]
    %v54 = vld [vmem:[%s1 + $0xf0] sm:$0xff]
    %v55 = vld [vmem:[%s1 + $0xf8] sm:$0x3]
    %v56 = vld [vmem:[%s1 + $0x100] sm:$0xff]
    %v57 = vld [vmem:[%s1 + $0x108] sm:$0x3]
    %v58 = vld [vmem:[%s1 + $0x110] sm:$0xff]
    %v59 = vld [vmem:[%s1 + $0x118] sm:$0x3]
    %v60 = vld [vmem:[%s1 + $0x120] sm:$0xff]
    %v61 = vld [vmem:[%s1 + $0x128] sm:$0x3]
    %v62 = vld [vmem:[%s1 + $0x130] sm:$0xff]
    %v63 = vld [vmem:[%s1 + $0x138] sm:$0x3]
    %v64 = vld [vmem:[%s2] sm:$0xff]
    %v65 = vld [vmem:[%s2 + $0x8] sm:$0x3]
    %v66 = vld [vmem:[%s2 + $0x10] sm:$0xff]
    %v67 = vld [vmem:[%s2 + $0x18] sm:$0x3]
    %v68 = vld [vmem:[%s2 + $0x20] sm:$0xff]
    %v69 = vld [vmem:[%s2 + $0x28] sm:$0x3]
    %v70 = vld [vmem:[%s2 + $0x30] sm:$0xff]
    %v71 = vld [vmem:[%s2 + $0x38] sm:$0x3]
    %v72 = vld [vmem:[%s2 + $0x40] sm:$0xff]
    %v73 = vld [vmem:[%s2 + $0x48] sm:$0x3]
    %v74 = vld [vmem:[%s2 + $0x50] sm:$0xff]
    %v75 = vld [vmem:[%s2 + $0x58] sm:$0x3]
    %v76 = vld [vmem:[%s2 + $0x60] sm:$0xff]
    %v77 = vld [vmem:[%s2 + $0x68] sm:$0x3]
    %v78 = vld [vmem:[%s2 + $0x70] sm:$0xff]
    %v79 = vld [vmem:[%s2 + $0x78] sm:$0x3]
    %v80 = vld [vmem:[%s2 + $0x80] sm:$0xff]
    %v81 = vld [vmem:[%s2 + $0x88] sm:$0x3]
    %v82 = vld [vmem:[%s2 + $0x90] sm:$0xff]
    %v83 = vld [vmem:[%s2 + $0x98] sm:$0x3]
    %v84 = vld [vmem:[%s2 + $0xa0] sm:$0xff]
    %v85 = vld [vmem:[%s2 + $0xa8] sm:$0x3]
    %v86 = vld [vmem:[%s2 + $0xb0] sm:$0xff]
    %v87 = vld [vmem:[%s2 + $0xb8] sm:$0x3]
    %v88 = vld [vmem:[%s2 + $0xc0] sm:$0xff]
    %v89 = vld [vmem:[%s2 + $0xc8] sm:$0x3]
    %v90 = vld [vmem:[%s2 + $0xd0] sm:$0xff]
    %v91 = vld [vmem:[%s2 + $0xd8] sm:$0x3]
    %v92 = vld [vmem:[%s2 + $0xe0] sm:$0xff]
    %v93 = vld [vmem:[%s2 + $0xe8] sm:$0x3]
    %v94 = vld [vmem:[%s2 + $0xf0] sm:$0xff]
    %v95 = vld [vmem:[%s2 + $0xf8] sm:$0x3]
    %v96 = vld [vmem:[%s2 + $0x100] sm:$0xff]
    %v97 = vld [vmem:[%s2 + $0x108] sm:$0x3]
    %v98 = vld [vmem:[%s2 + $0x110] sm:$0xff]
    %v99 = vld [vmem:[%s2 + $0x118] sm:$0x3]
    %v100 = vld [vmem:[%s2 + $0x120] sm:$0xff]
    %v101 = vld [vmem:[%s2 + $0x128] sm:$0x3]
    %v102 = vld [vmem:[%s2 + $0x130] sm:$0xff]
    %v103 = vld [vmem:[%s2 + $0x138] sm:$0x3]
    %v104 = vld [vmem:[%s3] sm:$0x1]
    %v105 = vld [vmem:[%s3 + $0x1] sm:$0x1]
    %v106 = vld [vmem:[%s3 + $0x2] sm:$0x1]
    %v107 = vld [vmem:[%s3 + $0x3] sm:$0x1]
    %v108 = vld [vmem:[%s3 + $0x4] sm:$0x1]
    %v109 = vld [vmem:[%s3 + $0x5] sm:$0x1]
    %v110 = vld [vmem:[%s3 + $0x6] sm:$0x1]
    %v111 = vld [vmem:[%s3 + $0x7] sm:$0x1]
    %v112 = vld [vmem:[%s3 + $0x8] sm:$0x1]
    %v113 = vld [vmem:[%s3 + $0x9] sm:$0x1]
    %v114 = vld [vmem:[%s3 + $0xa] sm:$0x1]
    %v115 = vld [vmem:[%s3 + $0xb] sm:$0x1]
    %v116 = vld [vmem:[%s3 + $0xc] sm:$0x1]
    %v117 = vld [vmem:[%s3 + $0xd] sm:$0x1]
    %v118 = vld [vmem:[%s3 + $0xe] sm:$0x1]
    %v119 = vld [vmem:[%s3 + $0xf] sm:$0x1]
    %v120 = vld [vmem:[%s3 + $0x10] sm:$0x1]
    %v121 = vld [vmem:[%s3 + $0x11] sm:$0x1]
    %v122 = vld [vmem:[%s3 + $0x12] sm:$0x1]
    %v123 = vld [vmem:[%s3 + $0x13] sm:$0x1]
    %v144 = vperm.slane %v104, 0
    %v145 = vperm.slane %v105, 0
    %v146 = vperm.slane %v106, 0
    %v147 = vperm.slane %v107, 0
    %v148 = vperm.slane %v108, 0
    %v149 = vperm.slane %v109, 0
    %v150 = vperm.slane %v110, 0
    %v151 = vperm.slane %v111, 0
    %v152 = vperm.slane %v112, 0
    %v153 = vperm.slane %v113, 0
    %v154 = vperm.slane %v114, 0
    %v155 = vperm.slane %v115, 0
    %v156 = vperm.slane %v116, 0
    %v157 = vperm.slane %v117, 0
    %v158 = vperm.slane %v118, 0
    %v159 = vperm.slane %v119, 0
    %v160 = vperm.slane %v120, 0
    %v161 = vperm.slane %v121, 0
    %v162 = vperm.slane %v122, 0
    %v163 = vperm.slane %v123, 0
    loop: start=0, step=1, limit=27
    $region26: #{tpu_custom_call.1} parent=1 // loop_pre_header
      _
    $region27: #{tpu_custom_call.1} parent=1 // loop_header
      %s185 = sphi 0, %s189
      %p186 = scmp.ge.s32.totalorder %s185, 27
      %v190 = vphi 0.0, %v2100
      %v191 = vphi 0.0, %v2101
      %v192 = vphi 0.0, %v2102
      %v193 = vphi 0.0, %v2103
      %v194 = vphi 0.0, %v2104
      %v195 = vphi 0.0, %v2105
      %v196 = vphi 0.0, %v2106
      %v197 = vphi 0.0, %v2107
      %v198 = vphi 0.0, %v2108
      %v199 = vphi 0.0, %v2109
      %v200 = vphi 0.0, %v2110
      %v201 = vphi 0.0, %v2111
      %v202 = vphi 0.0, %v2112
      %v203 = vphi 0.0, %v2113
      %v204 = vphi 0.0, %v2114
      %v205 = vphi 0.0, %v2115
      %v206 = vphi 0.0, %v2116
      %v207 = vphi 0.0, %v2117
      %v208 = vphi 0.0, %v2118
      %v209 = vphi 0.0, %v2119
      %v210 = vphi 0.0, %v2120
      %v211 = vphi 0.0, %v2121
      %v212 = vphi 0.0, %v2122
      %v213 = vphi 0.0, %v2123
      %v214 = vphi 0.0, %v2124
      %v215 = vphi 0.0, %v2125
      %v216 = vphi 0.0, %v2126
      %v217 = vphi 0.0, %v2127
      %v218 = vphi 0.0, %v2128
      %v219 = vphi 0.0, %v2129
      %v220 = vphi 0.0, %v2130
      %v221 = vphi 0.0, %v2131
      %v222 = vphi 0.0, %v2132
      %v223 = vphi 0.0, %v2133
      %v224 = vphi 0.0, %v2134
      %v225 = vphi 0.0, %v2135
      %v226 = vphi 0.0, %v2136
      %v227 = vphi 0.0, %v2137
      %v228 = vphi 0.0, %v2138
      %v229 = vphi 0.0, %v2139
    $region28: #{tpu_custom_call.1} parent=1 // loop_header_branch
      %188 = sbr.rel (%p186) target = $region32
    $region29: #{tpu_custom_call.1} parent=1 // loop_body
      %p230 = scmp.lt.s32.totalorder %s185, 7
      %s231 = scalar_select %p230, %s185, 7
      %s232 = smul.u32 %s231, 2
      %s233 = scalar_lea.vmem %s0, %s232
      %v234 = vld [vmem:[%s233] sm:$0x3]
      %254 = vrot.lane.b32.xlu0 %v190, 108
      %v255 = vpop.permute.xlu0 %254
      %256 = vrot.lane.b32.xlu0 %v191, 108
      %v257 = vpop.permute.xlu0 %256
      %258 = vrot.lane.b32.xlu0 %v192, 108
      %v259 = vpop.permute.xlu0 %258
      %260 = vrot.lane.b32.xlu0 %v193, 108
      %v261 = vpop.permute.xlu0 %260
      %262 = vrot.lane.b32.xlu0 %v194, 108
      %v263 = vpop.permute.xlu0 %262
      %264 = vrot.lane.b32.xlu0 %v195, 108
      %v265 = vpop.permute.xlu0 %264
      %266 = vrot.lane.b32.xlu0 %v196, 108
      %v267 = vpop.permute.xlu0 %266
      %268 = vrot.lane.b32.xlu0 %v197, 108
      %v269 = vpop.permute.xlu0 %268
      %270 = vrot.lane.b32.xlu0 %v198, 108
      %v271 = vpop.permute.xlu0 %270
      %272 = vrot.lane.b32.xlu0 %v199, 108
      %v273 = vpop.permute.xlu0 %272
      %274 = vrot.lane.b32.xlu0 %v200, 108
      %v275 = vpop.permute.xlu0 %274
      %276 = vrot.lane.b32.xlu0 %v201, 108
      %v277 = vpop.permute.xlu0 %276
      %278 = vrot.lane.b32.xlu0 %v202, 108
      %v279 = vpop.permute.xlu0 %278
      %280 = vrot.lane.b32.xlu0 %v203, 108
      %v281 = vpop.permute.xlu0 %280
      %282 = vrot.lane.b32.xlu0 %v204, 108
      %v283 = vpop.permute.xlu0 %282
      %284 = vrot.lane.b32.xlu0 %v205, 108
      %v285 = vpop.permute.xlu0 %284
      %286 = vrot.lane.b32.xlu0 %v206, 108
      %v287 = vpop.permute.xlu0 %286
      %288 = vrot.lane.b32.xlu0 %v207, 108
      %v289 = vpop.permute.xlu0 %288
      %290 = vrot.lane.b32.xlu0 %v208, 108
      %v291 = vpop.permute.xlu0 %290
      %vm292 = vcmask 80896
      %v293 = vsel %vm292, %v255, 0
      %vm295 = vcmask 1041408
      %v297 = vsel %vm295, %v65, 0
      %299 = vmatpush.msra.mxu0 0.0
      %300 = vmatpush.msra.mxu0 0.0
      %301 = vmatpush.msra.mxu0 0.0
      %302 = vmatpush.msra.mxu0 0.0
      %303 = vmatpush.msra.mxu0 0.0
      %304 = vmatpush.msra.mxu0 0.0
      %305 = vmatpush.msra.mxu0 0.0
      %306 = vmatpush.msra.mxu0 0.0
      %307 = vmatpush.msra.mxu0 0.0
      %308 = vmatpush.msra.mxu0 0.0
      %309 = vmatpush.msra.mxu0 0.0
      %310 = vmatpush.msra.mxu0 0.0
      %311 = vmatpush.msra.mxu0 0.0
      %312 = vmatpush.msra.mxu0 0.0
      %313 = vmatpush.msra.mxu0 %v297
      %314 = vmatpush.msra.mxu0 %v64
      %315 = vmatmul.f32.gmra.mxu0 %v293
      %v316 = vpop.f32.mrf.mxu0
      %v317 = vadd.f32 0.0, %v316
      %318 = vdwg.mxu0
      %v319 = vsel %vm292, %v257, 0
      %v322 = vsel %vm295, %v67, 0
      %324 = vmatpush.msra.mxu0 0.0
      %325 = vmatpush.msra.mxu0 0.0
      %326 = vmatpush.msra.mxu0 0.0
      %327 = vmatpush.msra.mxu0 0.0
      %328 = vmatpush.msra.mxu0 0.0
      %329 = vmatpush.msra.mxu0 0.0
      %330 = vmatpush.msra.mxu0 0.0
      %331 = vmatpush.msra.mxu0 0.0
      %332 = vmatpush.msra.mxu0 0.0
      %333 = vmatpush.msra.mxu0 0.0
      %334 = vmatpush.msra.mxu0 0.0
      %335 = vmatpush.msra.mxu0 0.0
      %336 = vmatpush.msra.mxu0 0.0
      %337 = vmatpush.msra.mxu0 0.0
      %338 = vmatpush.msra.mxu0 %v322
      %339 = vmatpush.msra.mxu0 %v66
      %340 = vmatmul.f32.gmra.mxu0 %v319
      %v341 = vpop.f32.mrf.mxu0
      %v342 = vadd.f32 0.0, %v341
      %343 = vdwg.mxu0
      %v344 = vsel %vm292, %v259, 0
      %v347 = vsel %vm295, %v69, 0
      %349 = vmatpush.msra.mxu0 0.0
      %350 = vmatpush.msra.mxu0 0.0
      %351 = vmatpush.msra.mxu0 0.0
      %352 = vmatpush.msra.mxu0 0.0
      %353 = vmatpush.msra.mxu0 0.0
      %354 = vmatpush.msra.mxu0 0.0
      %355 = vmatpush.msra.mxu0 0.0
      %356 = vmatpush.msra.mxu0 0.0
      %357 = vmatpush.msra.mxu0 0.0
      %358 = vmatpush.msra.mxu0 0.0
      %359 = vmatpush.msra.mxu0 0.0
      %360 = vmatpush.msra.mxu0 0.0
      %361 = vmatpush.msra.mxu0 0.0
      %362 = vmatpush.msra.mxu0 0.0
      %363 = vmatpush.msra.mxu0 %v347
      %364 = vmatpush.msra.mxu0 %v68
      %365 = vmatmul.f32.gmra.mxu0 %v344
      %v366 = vpop.f32.mrf.mxu0
      %v367 = vadd.f32 0.0, %v366
      %368 = vdwg.mxu0
      %v369 = vsel %vm292, %v261, 0
      %v372 = vsel %vm295, %v71, 0
      %374 = vmatpush.msra.mxu0 0.0
      %375 = vmatpush.msra.mxu0 0.0
      %376 = vmatpush.msra.mxu0 0.0
      %377 = vmatpush.msra.mxu0 0.0
      %378 = vmatpush.msra.mxu0 0.0
      %379 = vmatpush.msra.mxu0 0.0
      %380 = vmatpush.msra.mxu0 0.0
      %381 = vmatpush.msra.mxu0 0.0
      %382 = vmatpush.msra.mxu0 0.0
      %383 = vmatpush.msra.mxu0 0.0
      %384 = vmatpush.msra.mxu0 0.0
      %385 = vmatpush.msra.mxu0 0.0
      %386 = vmatpush.msra.mxu0 0.0
      %387 = vmatpush.msra.mxu0 0.0
      %388 = vmatpush.msra.mxu0 %v372
      %389 = vmatpush.msra.mxu0 %v70
      %390 = vmatmul.f32.gmra.mxu0 %v369
      %v391 = vpop.f32.mrf.mxu0
      %v392 = vadd.f32 0.0, %v391
      %393 = vdwg.mxu0
      %v394 = vsel %vm292, %v263, 0
      %v397 = vsel %vm295, %v73, 0
      %399 = vmatpush.msra.mxu0 0.0
      %400 = vmatpush.msra.mxu0 0.0
      %401 = vmatpush.msra.mxu0 0.0
      %402 = vmatpush.msra.mxu0 0.0
      %403 = vmatpush.msra.mxu0 0.0
      %404 = vmatpush.msra.mxu0 0.0
      %405 = vmatpush.msra.mxu0 0.0
      %406 = vmatpush.msra.mxu0 0.0
      %407 = vmatpush.msra.mxu0 0.0
      %408 = vmatpush.msra.mxu0 0.0
      %409 = vmatpush.msra.mxu0 0.0
      %410 = vmatpush.msra.mxu0 0.0
      %411 = vmatpush.msra.mxu0 0.0
      %412 = vmatpush.msra.mxu0 0.0
      %413 = vmatpush.msra.mxu0 %v397
      %414 = vmatpush.msra.mxu0 %v72
      %415 = vmatmul.f32.gmra.mxu0 %v394
      %v416 = vpop.f32.mrf.mxu0
      %v417 = vadd.f32 0.0, %v416
      %418 = vdwg.mxu0
      %v419 = vsel %vm292, %v265, 0
      %v422 = vsel %vm295, %v75, 0
      %424 = vmatpush.msra.mxu0 0.0
      %425 = vmatpush.msra.mxu0 0.0
      %426 = vmatpush.msra.mxu0 0.0
      %427 = vmatpush.msra.mxu0 0.0
      %428 = vmatpush.msra.mxu0 0.0
      %429 = vmatpush.msra.mxu0 0.0
      %430 = vmatpush.msra.mxu0 0.0
      %431 = vmatpush.msra.mxu0 0.0
      %432 = vmatpush.msra.mxu0 0.0
      %433 = vmatpush.msra.mxu0 0.0
      %434 = vmatpush.msra.mxu0 0.0
      %435 = vmatpush.msra.mxu0 0.0
      %436 = vmatpush.msra.mxu0 0.0
      %437 = vmatpush.msra.mxu0 0.0
      %438 = vmatpush.msra.mxu0 %v422
      %439 = vmatpush.msra.mxu0 %v74
      %440 = vmatmul.f32.gmra.mxu0 %v419
      %v441 = vpop.f32.mrf.mxu0
      %v442 = vadd.f32 0.0, %v441
      %443 = vdwg.mxu0
      %v444 = vsel %vm292, %v267, 0
      %v447 = vsel %vm295, %v77, 0
      %449 = vmatpush.msra.mxu0 0.0
      %450 = vmatpush.msra.mxu0 0.0
      %451 = vmatpush.msra.mxu0 0.0
      %452 = vmatpush.msra.mxu0 0.0
      %453 = vmatpush.msra.mxu0 0.0
      %454 = vmatpush.msra.mxu0 0.0
      %455 = vmatpush.msra.mxu0 0.0
      %456 = vmatpush.msra.mxu0 0.0
      %457 = vmatpush.msra.mxu0 0.0
      %458 = vmatpush.msra.mxu0 0.0
      %459 = vmatpush.msra.mxu0 0.0
      %460 = vmatpush.msra.mxu0 0.0
      %461 = vmatpush.msra.mxu0 0.0
      %462 = vmatpush.msra.mxu0 0.0
      %463 = vmatpush.msra.mxu0 %v447
      %464 = vmatpush.msra.mxu0 %v76
      %465 = vmatmul.f32.gmra.mxu0 %v444
      %v466 = vpop.f32.mrf.mxu0
      %v467 = vadd.f32 0.0, %v466
      %468 = vdwg.mxu0
      %v469 = vsel %vm292, %v269, 0
      %v472 = vsel %vm295, %v79, 0
      %474 = vmatpush.msra.mxu0 0.0
      %475 = vmatpush.msra.mxu0 0.0
      %476 = vmatpush.msra.mxu0 0.0
      %477 = vmatpush.msra.mxu0 0.0
      %478 = vmatpush.msra.mxu0 0.0
      %479 = vmatpush.msra.mxu0 0.0
      %480 = vmatpush.msra.mxu0 0.0
      %481 = vmatpush.msra.mxu0 0.0
      %482 = vmatpush.msra.mxu0 0.0
      %483 = vmatpush.msra.mxu0 0.0
      %484 = vmatpush.msra.mxu0 0.0
      %485 = vmatpush.msra.mxu0 0.0
      %486 = vmatpush.msra.mxu0 0.0
      %487 = vmatpush.msra.mxu0 0.0
      %488 = vmatpush.msra.mxu0 %v472
      %489 = vmatpush.msra.mxu0 %v78
      %490 = vmatmul.f32.gmra.mxu0 %v469
      %v491 = vpop.f32.mrf.mxu0
      %v492 = vadd.f32 0.0, %v491
      %493 = vdwg.mxu0
      %v494 = vsel %vm292, %v271, 0
      %v497 = vsel %vm295, %v81, 0
      %499 = vmatpush.msra.mxu0 0.0
      %500 = vmatpush.msra.mxu0 0.0
      %501 = vmatpush.msra.mxu0 0.0
      %502 = vmatpush.msra.mxu0 0.0
      %503 = vmatpush.msra.mxu0 0.0
      %504 = vmatpush.msra.mxu0 0.0
      %505 = vmatpush.msra.mxu0 0.0
      %506 = vmatpush.msra.mxu0 0.0
      %507 = vmatpush.msra.mxu0 0.0
      %508 = vmatpush.msra.mxu0 0.0
      %509 = vmatpush.msra.mxu0 0.0
      %510 = vmatpush.msra.mxu0 0.0
      %511 = vmatpush.msra.mxu0 0.0
      %512 = vmatpush.msra.mxu0 0.0
      %513 = vmatpush.msra.mxu0 %v497
      %514 = vmatpush.msra.mxu0 %v80
      %515 = vmatmul.f32.gmra.mxu0 %v494
      %v516 = vpop.f32.mrf.mxu0
      %v517 = vadd.f32 0.0, %v516
      %518 = vdwg.mxu0
      %v519 = vsel %vm292, %v273, 0
      %v522 = vsel %vm295, %v83, 0
      %524 = vmatpush.msra.mxu0 0.0
      %525 = vmatpush.msra.mxu0 0.0
      %526 = vmatpush.msra.mxu0 0.0
      %527 = vmatpush.msra.mxu0 0.0
      %528 = vmatpush.msra.mxu0 0.0
      %529 = vmatpush.msra.mxu0 0.0
      %530 = vmatpush.msra.mxu0 0.0
      %531 = vmatpush.msra.mxu0 0.0
      %532 = vmatpush.msra.mxu0 0.0
      %533 = vmatpush.msra.mxu0 0.0
      %534 = vmatpush.msra.mxu0 0.0
      %535 = vmatpush.msra.mxu0 0.0
      %536 = vmatpush.msra.mxu0 0.0
      %537 = vmatpush.msra.mxu0 0.0
      %538 = vmatpush.msra.mxu0 %v522
      %539 = vmatpush.msra.mxu0 %v82
      %540 = vmatmul.f32.gmra.mxu0 %v519
      %v541 = vpop.f32.mrf.mxu0
      %v542 = vadd.f32 0.0, %v541
      %543 = vdwg.mxu0
      %v544 = vsel %vm292, %v275, 0
      %v547 = vsel %vm295, %v85, 0
      %549 = vmatpush.msra.mxu0 0.0
      %550 = vmatpush.msra.mxu0 0.0
      %551 = vmatpush.msra.mxu0 0.0
      %552 = vmatpush.msra.mxu0 0.0
      %553 = vmatpush.msra.mxu0 0.0
      %554 = vmatpush.msra.mxu0 0.0
      %555 = vmatpush.msra.mxu0 0.0
      %556 = vmatpush.msra.mxu0 0.0
      %557 = vmatpush.msra.mxu0 0.0
      %558 = vmatpush.msra.mxu0 0.0
      %559 = vmatpush.msra.mxu0 0.0
      %560 = vmatpush.msra.mxu0 0.0
      %561 = vmatpush.msra.mxu0 0.0
      %562 = vmatpush.msra.mxu0 0.0
      %563 = vmatpush.msra.mxu0 %v547
      %564 = vmatpush.msra.mxu0 %v84
      %565 = vmatmul.f32.gmra.mxu0 %v544
      %v566 = vpop.f32.mrf.mxu0
      %v567 = vadd.f32 0.0, %v566
      %568 = vdwg.mxu0
      %v569 = vsel %vm292, %v277, 0
      %v572 = vsel %vm295, %v87, 0
      %574 = vmatpush.msra.mxu0 0.0
      %575 = vmatpush.msra.mxu0 0.0
      %576 = vmatpush.msra.mxu0 0.0
      %577 = vmatpush.msra.mxu0 0.0
      %578 = vmatpush.msra.mxu0 0.0
      %579 = vmatpush.msra.mxu0 0.0
      %580 = vmatpush.msra.mxu0 0.0
      %581 = vmatpush.msra.mxu0 0.0
      %582 = vmatpush.msra.mxu0 0.0
      %583 = vmatpush.msra.mxu0 0.0
      %584 = vmatpush.msra.mxu0 0.0
      %585 = vmatpush.msra.mxu0 0.0
      %586 = vmatpush.msra.mxu0 0.0
      %587 = vmatpush.msra.mxu0 0.0
      %588 = vmatpush.msra.mxu0 %v572
      %589 = vmatpush.msra.mxu0 %v86
      %590 = vmatmul.f32.gmra.mxu0 %v569
      %v591 = vpop.f32.mrf.mxu0
      %v592 = vadd.f32 0.0, %v591
      %593 = vdwg.mxu0
      %v594 = vsel %vm292, %v279, 0
      %v597 = vsel %vm295, %v89, 0
      %599 = vmatpush.msra.mxu0 0.0
      %600 = vmatpush.msra.mxu0 0.0
      %601 = vmatpush.msra.mxu0 0.0
      %602 = vmatpush.msra.mxu0 0.0
      %603 = vmatpush.msra.mxu0 0.0
      %604 = vmatpush.msra.mxu0 0.0
      %605 = vmatpush.msra.mxu0 0.0
      %606 = vmatpush.msra.mxu0 0.0
      %607 = vmatpush.msra.mxu0 0.0
      %608 = vmatpush.msra.mxu0 0.0
      %609 = vmatpush.msra.mxu0 0.0
      %610 = vmatpush.msra.mxu0 0.0
      %611 = vmatpush.msra.mxu0 0.0
      %612 = vmatpush.msra.mxu0 0.0
      %613 = vmatpush.msra.mxu0 %v597
      %614 = vmatpush.msra.mxu0 %v88
      %615 = vmatmul.f32.gmra.mxu0 %v594
      %v616 = vpop.f32.mrf.mxu0
      %v617 = vadd.f32 0.0, %v616
      %618 = vdwg.mxu0
      %v619 = vsel %vm292, %v281, 0
      %v622 = vsel %vm295, %v91, 0
      %624 = vmatpush.msra.mxu0 0.0
      %625 = vmatpush.msra.mxu0 0.0
      %626 = vmatpush.msra.mxu0 0.0
      %627 = vmatpush.msra.mxu0 0.0
      %628 = vmatpush.msra.mxu0 0.0
      %629 = vmatpush.msra.mxu0 0.0
      %630 = vmatpush.msra.mxu0 0.0
      %631 = vmatpush.msra.mxu0 0.0
      %632 = vmatpush.msra.mxu0 0.0
      %633 = vmatpush.msra.mxu0 0.0
      %634 = vmatpush.msra.mxu0 0.0
      %635 = vmatpush.msra.mxu0 0.0
      %636 = vmatpush.msra.mxu0 0.0
      %637 = vmatpush.msra.mxu0 0.0
      %638 = vmatpush.msra.mxu0 %v622
      %639 = vmatpush.msra.mxu0 %v90
      %640 = vmatmul.f32.gmra.mxu0 %v619
      %v641 = vpop.f32.mrf.mxu0
      %v642 = vadd.f32 0.0, %v641
      %643 = vdwg.mxu0
      %v644 = vsel %vm292, %v283, 0
      %v647 = vsel %vm295, %v93, 0
      %649 = vmatpush.msra.mxu0 0.0
      %650 = vmatpush.msra.mxu0 0.0
      %651 = vmatpush.msra.mxu0 0.0
      %652 = vmatpush.msra.mxu0 0.0
      %653 = vmatpush.msra.mxu0 0.0
      %654 = vmatpush.msra.mxu0 0.0
      %655 = vmatpush.msra.mxu0 0.0
      %656 = vmatpush.msra.mxu0 0.0
      %657 = vmatpush.msra.mxu0 0.0
      %658 = vmatpush.msra.mxu0 0.0
      %659 = vmatpush.msra.mxu0 0.0
      %660 = vmatpush.msra.mxu0 0.0
      %661 = vmatpush.msra.mxu0 0.0
      %662 = vmatpush.msra.mxu0 0.0
      %663 = vmatpush.msra.mxu0 %v647
      %664 = vmatpush.msra.mxu0 %v92
      %665 = vmatmul.f32.gmra.mxu0 %v644
      %v666 = vpop.f32.mrf.mxu0
      %v667 = vadd.f32 0.0, %v666
      %668 = vdwg.mxu0
      %v669 = vsel %vm292, %v285, 0
      %v672 = vsel %vm295, %v95, 0
      %674 = vmatpush.msra.mxu0 0.0
      %675 = vmatpush.msra.mxu0 0.0
      %676 = vmatpush.msra.mxu0 0.0
      %677 = vmatpush.msra.mxu0 0.0
      %678 = vmatpush.msra.mxu0 0.0
      %679 = vmatpush.msra.mxu0 0.0
      %680 = vmatpush.msra.mxu0 0.0
      %681 = vmatpush.msra.mxu0 0.0
      %682 = vmatpush.msra.mxu0 0.0
      %683 = vmatpush.msra.mxu0 0.0
      %684 = vmatpush.msra.mxu0 0.0
      %685 = vmatpush.msra.mxu0 0.0
      %686 = vmatpush.msra.mxu0 0.0
      %687 = vmatpush.msra.mxu0 0.0
      %688 = vmatpush.msra.mxu0 %v672
      %689 = vmatpush.msra.mxu0 %v94
      %690 = vmatmul.f32.gmra.mxu0 %v669
      %v691 = vpop.f32.mrf.mxu0
      %v692 = vadd.f32 0.0, %v691
      %693 = vdwg.mxu0
      %v694 = vsel %vm292, %v287, 0
      %v697 = vsel %vm295, %v97, 0
      %699 = vmatpush.msra.mxu0 0.0
      %700 = vmatpush.msra.mxu0 0.0
      %701 = vmatpush.msra.mxu0 0.0
      %702 = vmatpush.msra.mxu0 0.0
      %703 = vmatpush.msra.mxu0 0.0
      %704 = vmatpush.msra.mxu0 0.0
      %705 = vmatpush.msra.mxu0 0.0
      %706 = vmatpush.msra.mxu0 0.0
      %707 = vmatpush.msra.mxu0 0.0
      %708 = vmatpush.msra.mxu0 0.0
      %709 = vmatpush.msra.mxu0 0.0
      %710 = vmatpush.msra.mxu0 0.0
      %711 = vmatpush.msra.mxu0 0.0
      %712 = vmatpush.msra.mxu0 0.0
      %713 = vmatpush.msra.mxu0 %v697
      %714 = vmatpush.msra.mxu0 %v96
      %715 = vmatmul.f32.gmra.mxu0 %v694
      %v716 = vpop.f32.mrf.mxu0
      %v717 = vadd.f32 0.0, %v716
      %718 = vdwg.mxu0
      %v719 = vsel %vm292, %v289, 0
      %v722 = vsel %vm295, %v99, 0
      %724 = vmatpush.msra.mxu0 0.0
      %725 = vmatpush.msra.mxu0 0.0
      %726 = vmatpush.msra.mxu0 0.0
      %727 = vmatpush.msra.mxu0 0.0
      %728 = vmatpush.msra.mxu0 0.0
      %729 = vmatpush.msra.mxu0 0.0
      %730 = vmatpush.msra.mxu0 0.0
      %731 = vmatpush.msra.mxu0 0.0
      %732 = vmatpush.msra.mxu0 0.0
      %733 = vmatpush.msra.mxu0 0.0
      %734 = vmatpush.msra.mxu0 0.0
      %735 = vmatpush.msra.mxu0 0.0
      %736 = vmatpush.msra.mxu0 0.0
      %737 = vmatpush.msra.mxu0 0.0
      %738 = vmatpush.msra.mxu0 %v722
      %739 = vmatpush.msra.mxu0 %v98
      %740 = vmatmul.f32.gmra.mxu0 %v719
      %v741 = vpop.f32.mrf.mxu0
      %v742 = vadd.f32 0.0, %v741
      %743 = vdwg.mxu0
      %v744 = vsel %vm292, %v291, 0
      %v747 = vsel %vm295, %v101, 0
      %749 = vmatpush.msra.mxu0 0.0
      %750 = vmatpush.msra.mxu0 0.0
      %751 = vmatpush.msra.mxu0 0.0
      %752 = vmatpush.msra.mxu0 0.0
      %753 = vmatpush.msra.mxu0 0.0
      %754 = vmatpush.msra.mxu0 0.0
      %755 = vmatpush.msra.mxu0 0.0
      %756 = vmatpush.msra.mxu0 0.0
      %757 = vmatpush.msra.mxu0 0.0
      %758 = vmatpush.msra.mxu0 0.0
      %759 = vmatpush.msra.mxu0 0.0
      %760 = vmatpush.msra.mxu0 0.0
      %761 = vmatpush.msra.mxu0 0.0
      %762 = vmatpush.msra.mxu0 0.0
      %763 = vmatpush.msra.mxu0 %v747
      %764 = vmatpush.msra.mxu0 %v100
      %765 = vmatmul.f32.gmra.mxu0 %v744
      %v766 = vpop.f32.mrf.mxu0
      %v767 = vadd.f32 0.0, %v766
      %768 = vdwg.mxu0
      %770 = vrot.lane.b32.xlu0 %v209, 108
      %v771 = vpop.permute.xlu0 %770
      %v772 = vsel %vm292, %v771, 0
      %v775 = vsel %vm295, %v103, 0
      %777 = vmatpush.msra.mxu0 0.0
      %778 = vmatpush.msra.mxu0 0.0
      %779 = vmatpush.msra.mxu0 0.0
      %780 = vmatpush.msra.mxu0 0.0
      %781 = vmatpush.msra.mxu0 0.0
      %782 = vmatpush.msra.mxu0 0.0
      %783 = vmatpush.msra.mxu0 0.0
      %784 = vmatpush.msra.mxu0 0.0
      %785 = vmatpush.msra.mxu0 0.0
      %786 = vmatpush.msra.mxu0 0.0
      %787 = vmatpush.msra.mxu0 0.0
      %788 = vmatpush.msra.mxu0 0.0
      %789 = vmatpush.msra.mxu0 0.0
      %790 = vmatpush.msra.mxu0 0.0
      %791 = vmatpush.msra.mxu0 %v775
      %792 = vmatpush.msra.mxu0 %v102
      %793 = vmatmul.f32.gmra.mxu0 %v772
      %v794 = vpop.f32.mrf.mxu0
      %v795 = vadd.f32 0.0, %v794
      %796 = vdwg.mxu0
      %v798 = vsel %vm292, %v234, 0
      %v801 = vsel %vm295, %v25, 0
      %803 = vmatpush.msra.mxu0 0.0
      %804 = vmatpush.msra.mxu0 0.0
      %805 = vmatpush.msra.mxu0 0.0
      %806 = vmatpush.msra.mxu0 0.0
      %807 = vmatpush.msra.mxu0 0.0
      %808 = vmatpush.msra.mxu0 0.0
      %809 = vmatpush.msra.mxu0 0.0
      %810 = vmatpush.msra.mxu0 0.0
      %811 = vmatpush.msra.mxu0 0.0
      %812 = vmatpush.msra.mxu0 0.0
      %813 = vmatpush.msra.mxu0 0.0
      %814 = vmatpush.msra.mxu0 0.0
      %815 = vmatpush.msra.mxu0 0.0
      %816 = vmatpush.msra.mxu0 0.0
      %817 = vmatpush.msra.mxu0 %v801
      %818 = vmatpush.msra.mxu0 %v24
      %819 = vmatmul.f32.gmra.mxu0 %v798
      %v820 = vpop.f32.mrf.mxu0
      %v821 = vadd.f32 %v317, %v820
      %822 = vdwg.mxu0
      %v824 = vsel %vm295, %v27, 0
      %826 = vmatpush.msra.mxu0 0.0
      %827 = vmatpush.msra.mxu0 0.0
      %828 = vmatpush.msra.mxu0 0.0
      %829 = vmatpush.msra.mxu0 0.0
      %830 = vmatpush.msra.mxu0 0.0
      %831 = vmatpush.msra.mxu0 0.0
      %832 = vmatpush.msra.mxu0 0.0
      %833 = vmatpush.msra.mxu0 0.0
      %834 = vmatpush.msra.mxu0 0.0
      %835 = vmatpush.msra.mxu0 0.0
      %836 = vmatpush.msra.mxu0 0.0
      %837 = vmatpush.msra.mxu0 0.0
      %838 = vmatpush.msra.mxu0 0.0
      %839 = vmatpush.msra.mxu0 0.0
      %840 = vmatpush.msra.mxu0 %v824
      %841 = vmatpush.msra.mxu0 %v26
      %842 = vmatmul.f32.gmra.mxu0 %v293
      %v843 = vpop.f32.mrf.mxu0
      %v844 = vadd.f32 %v342, %v843
      %845 = vdwg.mxu0
      %v847 = vsel %vm295, %v29, 0
      %849 = vmatpush.msra.mxu0 0.0
      %850 = vmatpush.msra.mxu0 0.0
      %851 = vmatpush.msra.mxu0 0.0
      %852 = vmatpush.msra.mxu0 0.0
      %853 = vmatpush.msra.mxu0 0.0
      %854 = vmatpush.msra.mxu0 0.0
      %855 = vmatpush.msra.mxu0 0.0
      %856 = vmatpush.msra.mxu0 0.0
      %857 = vmatpush.msra.mxu0 0.0
      %858 = vmatpush.msra.mxu0 0.0
      %859 = vmatpush.msra.mxu0 0.0
      %860 = vmatpush.msra.mxu0 0.0
      %861 = vmatpush.msra.mxu0 0.0
      %862 = vmatpush.msra.mxu0 0.0
      %863 = vmatpush.msra.mxu0 %v847
      %864 = vmatpush.msra.mxu0 %v28
      %865 = vmatmul.f32.gmra.mxu0 %v319
      %v866 = vpop.f32.mrf.mxu0
      %v867 = vadd.f32 %v367, %v866
      %868 = vdwg.mxu0
      %v870 = vsel %vm295, %v31, 0
      %872 = vmatpush.msra.mxu0 0.0
      %873 = vmatpush.msra.mxu0 0.0
      %874 = vmatpush.msra.mxu0 0.0
      %875 = vmatpush.msra.mxu0 0.0
      %876 = vmatpush.msra.mxu0 0.0
      %877 = vmatpush.msra.mxu0 0.0
      %878 = vmatpush.msra.mxu0 0.0
      %879 = vmatpush.msra.mxu0 0.0
      %880 = vmatpush.msra.mxu0 0.0
      %881 = vmatpush.msra.mxu0 0.0
      %882 = vmatpush.msra.mxu0 0.0
      %883 = vmatpush.msra.mxu0 0.0
      %884 = vmatpush.msra.mxu0 0.0
      %885 = vmatpush.msra.mxu0 0.0
      %886 = vmatpush.msra.mxu0 %v870
      %887 = vmatpush.msra.mxu0 %v30
      %888 = vmatmul.f32.gmra.mxu0 %v344
      %v889 = vpop.f32.mrf.mxu0
      %v890 = vadd.f32 %v392, %v889
      %891 = vdwg.mxu0
      %v893 = vsel %vm295, %v33, 0
      %895 = vmatpush.msra.mxu0 0.0
      %896 = vmatpush.msra.mxu0 0.0
      %897 = vmatpush.msra.mxu0 0.0
      %898 = vmatpush.msra.mxu0 0.0
      %899 = vmatpush.msra.mxu0 0.0
      %900 = vmatpush.msra.mxu0 0.0
      %901 = vmatpush.msra.mxu0 0.0
      %902 = vmatpush.msra.mxu0 0.0
      %903 = vmatpush.msra.mxu0 0.0
      %904 = vmatpush.msra.mxu0 0.0
      %905 = vmatpush.msra.mxu0 0.0
      %906 = vmatpush.msra.mxu0 0.0
      %907 = vmatpush.msra.mxu0 0.0
      %908 = vmatpush.msra.mxu0 0.0
      %909 = vmatpush.msra.mxu0 %v893
      %910 = vmatpush.msra.mxu0 %v32
      %911 = vmatmul.f32.gmra.mxu0 %v369
      %v912 = vpop.f32.mrf.mxu0
      %v913 = vadd.f32 %v417, %v912
      %914 = vdwg.mxu0
      %v916 = vsel %vm295, %v35, 0
      %918 = vmatpush.msra.mxu0 0.0
      %919 = vmatpush.msra.mxu0 0.0
      %920 = vmatpush.msra.mxu0 0.0
      %921 = vmatpush.msra.mxu0 0.0
      %922 = vmatpush.msra.mxu0 0.0
      %923 = vmatpush.msra.mxu0 0.0
      %924 = vmatpush.msra.mxu0 0.0
      %925 = vmatpush.msra.mxu0 0.0
      %926 = vmatpush.msra.mxu0 0.0
      %927 = vmatpush.msra.mxu0 0.0
      %928 = vmatpush.msra.mxu0 0.0
      %929 = vmatpush.msra.mxu0 0.0
      %930 = vmatpush.msra.mxu0 0.0
      %931 = vmatpush.msra.mxu0 0.0
      %932 = vmatpush.msra.mxu0 %v916
      %933 = vmatpush.msra.mxu0 %v34
      %934 = vmatmul.f32.gmra.mxu0 %v394
      %v935 = vpop.f32.mrf.mxu0
      %v936 = vadd.f32 %v442, %v935
      %937 = vdwg.mxu0
      %v939 = vsel %vm295, %v37, 0
      %941 = vmatpush.msra.mxu0 0.0
      %942 = vmatpush.msra.mxu0 0.0
      %943 = vmatpush.msra.mxu0 0.0
      %944 = vmatpush.msra.mxu0 0.0
      %945 = vmatpush.msra.mxu0 0.0
      %946 = vmatpush.msra.mxu0 0.0
      %947 = vmatpush.msra.mxu0 0.0
      %948 = vmatpush.msra.mxu0 0.0
      %949 = vmatpush.msra.mxu0 0.0
      %950 = vmatpush.msra.mxu0 0.0
      %951 = vmatpush.msra.mxu0 0.0
      %952 = vmatpush.msra.mxu0 0.0
      %953 = vmatpush.msra.mxu0 0.0
      %954 = vmatpush.msra.mxu0 0.0
      %955 = vmatpush.msra.mxu0 %v939
      %956 = vmatpush.msra.mxu0 %v36
      %957 = vmatmul.f32.gmra.mxu0 %v419
      %v958 = vpop.f32.mrf.mxu0
      %v959 = vadd.f32 %v467, %v958
      %960 = vdwg.mxu0
      %v962 = vsel %vm295, %v39, 0
      %964 = vmatpush.msra.mxu0 0.0
      %965 = vmatpush.msra.mxu0 0.0
      %966 = vmatpush.msra.mxu0 0.0
      %967 = vmatpush.msra.mxu0 0.0
      %968 = vmatpush.msra.mxu0 0.0
      %969 = vmatpush.msra.mxu0 0.0
      %970 = vmatpush.msra.mxu0 0.0
      %971 = vmatpush.msra.mxu0 0.0
      %972 = vmatpush.msra.mxu0 0.0
      %973 = vmatpush.msra.mxu0 0.0
      %974 = vmatpush.msra.mxu0 0.0
      %975 = vmatpush.msra.mxu0 0.0
      %976 = vmatpush.msra.mxu0 0.0
      %977 = vmatpush.msra.mxu0 0.0
      %978 = vmatpush.msra.mxu0 %v962
      %979 = vmatpush.msra.mxu0 %v38
      %980 = vmatmul.f32.gmra.mxu0 %v444
      %v981 = vpop.f32.mrf.mxu0
      %v982 = vadd.f32 %v492, %v981
      %983 = vdwg.mxu0
      %v985 = vsel %vm295, %v41, 0
      %987 = vmatpush.msra.mxu0 0.0
      %988 = vmatpush.msra.mxu0 0.0
      %989 = vmatpush.msra.mxu0 0.0
      %990 = vmatpush.msra.mxu0 0.0
      %991 = vmatpush.msra.mxu0 0.0
      %992 = vmatpush.msra.mxu0 0.0
      %993 = vmatpush.msra.mxu0 0.0
      %994 = vmatpush.msra.mxu0 0.0
      %995 = vmatpush.msra.mxu0 0.0
      %996 = vmatpush.msra.mxu0 0.0
      %997 = vmatpush.msra.mxu0 0.0
      %998 = vmatpush.msra.mxu0 0.0
      %999 = vmatpush.msra.mxu0 0.0
      %1000 = vmatpush.msra.mxu0 0.0
      %1001 = vmatpush.msra.mxu0 %v985
      %1002 = vmatpush.msra.mxu0 %v40
      %1003 = vmatmul.f32.gmra.mxu0 %v469
      %v1004 = vpop.f32.mrf.mxu0
      %v1005 = vadd.f32 %v517, %v1004
      %1006 = vdwg.mxu0
      %v1008 = vsel %vm295, %v43, 0
      %1010 = vmatpush.msra.mxu0 0.0
      %1011 = vmatpush.msra.mxu0 0.0
      %1012 = vmatpush.msra.mxu0 0.0
      %1013 = vmatpush.msra.mxu0 0.0
      %1014 = vmatpush.msra.mxu0 0.0
      %1015 = vmatpush.msra.mxu0 0.0
      %1016 = vmatpush.msra.mxu0 0.0
      %1017 = vmatpush.msra.mxu0 0.0
      %1018 = vmatpush.msra.mxu0 0.0
      %1019 = vmatpush.msra.mxu0 0.0
      %1020 = vmatpush.msra.mxu0 0.0
      %1021 = vmatpush.msra.mxu0 0.0
      %1022 = vmatpush.msra.mxu0 0.0
      %1023 = vmatpush.msra.mxu0 0.0
      %1024 = vmatpush.msra.mxu0 %v1008
      %1025 = vmatpush.msra.mxu0 %v42
      %1026 = vmatmul.f32.gmra.mxu0 %v494
      %v1027 = vpop.f32.mrf.mxu0
      %v1028 = vadd.f32 %v542, %v1027
      %1029 = vdwg.mxu0
      %v1031 = vsel %vm295, %v45, 0
      %1033 = vmatpush.msra.mxu0 0.0
      %1034 = vmatpush.msra.mxu0 0.0
      %1035 = vmatpush.msra.mxu0 0.0
      %1036 = vmatpush.msra.mxu0 0.0
      %1037 = vmatpush.msra.mxu0 0.0
      %1038 = vmatpush.msra.mxu0 0.0
      %1039 = vmatpush.msra.mxu0 0.0
      %1040 = vmatpush.msra.mxu0 0.0
      %1041 = vmatpush.msra.mxu0 0.0
      %1042 = vmatpush.msra.mxu0 0.0
      %1043 = vmatpush.msra.mxu0 0.0
      %1044 = vmatpush.msra.mxu0 0.0
      %1045 = vmatpush.msra.mxu0 0.0
      %1046 = vmatpush.msra.mxu0 0.0
      %1047 = vmatpush.msra.mxu0 %v1031
      %1048 = vmatpush.msra.mxu0 %v44
      %1049 = vmatmul.f32.gmra.mxu0 %v519
      %v1050 = vpop.f32.mrf.mxu0
      %v1051 = vadd.f32 %v567, %v1050
      %1052 = vdwg.mxu0
      %v1054 = vsel %vm295, %v47, 0
      %1056 = vmatpush.msra.mxu0 0.0
      %1057 = vmatpush.msra.mxu0 0.0
      %1058 = vmatpush.msra.mxu0 0.0
      %1059 = vmatpush.msra.mxu0 0.0
      %1060 = vmatpush.msra.mxu0 0.0
      %1061 = vmatpush.msra.mxu0 0.0
      %1062 = vmatpush.msra.mxu0 0.0
      %1063 = vmatpush.msra.mxu0 0.0
      %1064 = vmatpush.msra.mxu0 0.0
      %1065 = vmatpush.msra.mxu0 0.0
      %1066 = vmatpush.msra.mxu0 0.0
      %1067 = vmatpush.msra.mxu0 0.0
      %1068 = vmatpush.msra.mxu0 0.0
      %1069 = vmatpush.msra.mxu0 0.0
      %1070 = vmatpush.msra.mxu0 %v1054
      %1071 = vmatpush.msra.mxu0 %v46
      %1072 = vmatmul.f32.gmra.mxu0 %v544
      %v1073 = vpop.f32.mrf.mxu0
      %v1074 = vadd.f32 %v592, %v1073
      %1075 = vdwg.mxu0
      %v1077 = vsel %vm295, %v49, 0
      %1079 = vmatpush.msra.mxu0 0.0
      %1080 = vmatpush.msra.mxu0 0.0
      %1081 = vmatpush.msra.mxu0 0.0
      %1082 = vmatpush.msra.mxu0 0.0
      %1083 = vmatpush.msra.mxu0 0.0
      %1084 = vmatpush.msra.mxu0 0.0
      %1085 = vmatpush.msra.mxu0 0.0
      %1086 = vmatpush.msra.mxu0 0.0
      %1087 = vmatpush.msra.mxu0 0.0
      %1088 = vmatpush.msra.mxu0 0.0
      %1089 = vmatpush.msra.mxu0 0.0
      %1090 = vmatpush.msra.mxu0 0.0
      %1091 = vmatpush.msra.mxu0 0.0
      %1092 = vmatpush.msra.mxu0 0.0
      %1093 = vmatpush.msra.mxu0 %v1077
      %1094 = vmatpush.msra.mxu0 %v48
      %1095 = vmatmul.f32.gmra.mxu0 %v569
      %v1096 = vpop.f32.mrf.mxu0
      %v1097 = vadd.f32 %v617, %v1096
      %1098 = vdwg.mxu0
      %v1100 = vsel %vm295, %v51, 0
      %1102 = vmatpush.msra.mxu0 0.0
      %1103 = vmatpush.msra.mxu0 0.0
      %1104 = vmatpush.msra.mxu0 0.0
      %1105 = vmatpush.msra.mxu0 0.0
      %1106 = vmatpush.msra.mxu0 0.0
      %1107 = vmatpush.msra.mxu0 0.0
      %1108 = vmatpush.msra.mxu0 0.0
      %1109 = vmatpush.msra.mxu0 0.0
      %1110 = vmatpush.msra.mxu0 0.0
      %1111 = vmatpush.msra.mxu0 0.0
      %1112 = vmatpush.msra.mxu0 0.0
      %1113 = vmatpush.msra.mxu0 0.0
      %1114 = vmatpush.msra.mxu0 0.0
      %1115 = vmatpush.msra.mxu0 0.0
      %1116 = vmatpush.msra.mxu0 %v1100
      %1117 = vmatpush.msra.mxu0 %v50
      %1118 = vmatmul.f32.gmra.mxu0 %v594
      %v1119 = vpop.f32.mrf.mxu0
      %v1120 = vadd.f32 %v642, %v1119
      %1121 = vdwg.mxu0
      %v1123 = vsel %vm295, %v53, 0
      %1125 = vmatpush.msra.mxu0 0.0
      %1126 = vmatpush.msra.mxu0 0.0
      %1127 = vmatpush.msra.mxu0 0.0
      %1128 = vmatpush.msra.mxu0 0.0
      %1129 = vmatpush.msra.mxu0 0.0
      %1130 = vmatpush.msra.mxu0 0.0
      %1131 = vmatpush.msra.mxu0 0.0
      %1132 = vmatpush.msra.mxu0 0.0
      %1133 = vmatpush.msra.mxu0 0.0
      %1134 = vmatpush.msra.mxu0 0.0
      %1135 = vmatpush.msra.mxu0 0.0
      %1136 = vmatpush.msra.mxu0 0.0
      %1137 = vmatpush.msra.mxu0 0.0
      %1138 = vmatpush.msra.mxu0 0.0
      %1139 = vmatpush.msra.mxu0 %v1123
      %1140 = vmatpush.msra.mxu0 %v52
      %1141 = vmatmul.f32.gmra.mxu0 %v619
      %v1142 = vpop.f32.mrf.mxu0
      %v1143 = vadd.f32 %v667, %v1142
      %1144 = vdwg.mxu0
      %v1146 = vsel %vm295, %v55, 0
      %1148 = vmatpush.msra.mxu0 0.0
      %1149 = vmatpush.msra.mxu0 0.0
      %1150 = vmatpush.msra.mxu0 0.0
      %1151 = vmatpush.msra.mxu0 0.0
      %1152 = vmatpush.msra.mxu0 0.0
      %1153 = vmatpush.msra.mxu0 0.0
      %1154 = vmatpush.msra.mxu0 0.0
      %1155 = vmatpush.msra.mxu0 0.0
      %1156 = vmatpush.msra.mxu0 0.0
      %1157 = vmatpush.msra.mxu0 0.0
      %1158 = vmatpush.msra.mxu0 0.0
      %1159 = vmatpush.msra.mxu0 0.0
      %1160 = vmatpush.msra.mxu0 0.0
      %1161 = vmatpush.msra.mxu0 0.0
      %1162 = vmatpush.msra.mxu0 %v1146
      %1163 = vmatpush.msra.mxu0 %v54
      %1164 = vmatmul.f32.gmra.mxu0 %v644
      %v1165 = vpop.f32.mrf.mxu0
      %v1166 = vadd.f32 %v692, %v1165
      %1167 = vdwg.mxu0
      %v1169 = vsel %vm295, %v57, 0
      %1171 = vmatpush.msra.mxu0 0.0
      %1172 = vmatpush.msra.mxu0 0.0
      %1173 = vmatpush.msra.mxu0 0.0
      %1174 = vmatpush.msra.mxu0 0.0
      %1175 = vmatpush.msra.mxu0 0.0
      %1176 = vmatpush.msra.mxu0 0.0
      %1177 = vmatpush.msra.mxu0 0.0
      %1178 = vmatpush.msra.mxu0 0.0
      %1179 = vmatpush.msra.mxu0 0.0
      %1180 = vmatpush.msra.mxu0 0.0
      %1181 = vmatpush.msra.mxu0 0.0
      %1182 = vmatpush.msra.mxu0 0.0
      %1183 = vmatpush.msra.mxu0 0.0
      %1184 = vmatpush.msra.mxu0 0.0
      %1185 = vmatpush.msra.mxu0 %v1169
      %1186 = vmatpush.msra.mxu0 %v56
      %1187 = vmatmul.f32.gmra.mxu0 %v669
      %v1188 = vpop.f32.mrf.mxu0
      %v1189 = vadd.f32 %v717, %v1188
      %1190 = vdwg.mxu0
      %v1192 = vsel %vm295, %v59, 0
      %1194 = vmatpush.msra.mxu0 0.0
      %1195 = vmatpush.msra.mxu0 0.0
      %1196 = vmatpush.msra.mxu0 0.0
      %1197 = vmatpush.msra.mxu0 0.0
      %1198 = vmatpush.msra.mxu0 0.0
      %1199 = vmatpush.msra.mxu0 0.0
      %1200 = vmatpush.msra.mxu0 0.0
      %1201 = vmatpush.msra.mxu0 0.0
      %1202 = vmatpush.msra.mxu0 0.0
      %1203 = vmatpush.msra.mxu0 0.0
      %1204 = vmatpush.msra.mxu0 0.0
      %1205 = vmatpush.msra.mxu0 0.0
      %1206 = vmatpush.msra.mxu0 0.0
      %1207 = vmatpush.msra.mxu0 0.0
      %1208 = vmatpush.msra.mxu0 %v1192
      %1209 = vmatpush.msra.mxu0 %v58
      %1210 = vmatmul.f32.gmra.mxu0 %v694
      %v1211 = vpop.f32.mrf.mxu0
      %v1212 = vadd.f32 %v742, %v1211
      %1213 = vdwg.mxu0
      %v1215 = vsel %vm295, %v61, 0
      %1217 = vmatpush.msra.mxu0 0.0
      %1218 = vmatpush.msra.mxu0 0.0
      %1219 = vmatpush.msra.mxu0 0.0
      %1220 = vmatpush.msra.mxu0 0.0
      %1221 = vmatpush.msra.mxu0 0.0
      %1222 = vmatpush.msra.mxu0 0.0
      %1223 = vmatpush.msra.mxu0 0.0
      %1224 = vmatpush.msra.mxu0 0.0
      %1225 = vmatpush.msra.mxu0 0.0
      %1226 = vmatpush.msra.mxu0 0.0
      %1227 = vmatpush.msra.mxu0 0.0
      %1228 = vmatpush.msra.mxu0 0.0
      %1229 = vmatpush.msra.mxu0 0.0
      %1230 = vmatpush.msra.mxu0 0.0
      %1231 = vmatpush.msra.mxu0 %v1215
      %1232 = vmatpush.msra.mxu0 %v60
      %1233 = vmatmul.f32.gmra.mxu0 %v719
      %v1234 = vpop.f32.mrf.mxu0
      %v1235 = vadd.f32 %v767, %v1234
      %1236 = vdwg.mxu0
      %v1238 = vsel %vm295, %v63, 0
      %1240 = vmatpush.msra.mxu0 0.0
      %1241 = vmatpush.msra.mxu0 0.0
      %1242 = vmatpush.msra.mxu0 0.0
      %1243 = vmatpush.msra.mxu0 0.0
      %1244 = vmatpush.msra.mxu0 0.0
      %1245 = vmatpush.msra.mxu0 0.0
      %1246 = vmatpush.msra.mxu0 0.0
      %1247 = vmatpush.msra.mxu0 0.0
      %1248 = vmatpush.msra.mxu0 0.0
      %1249 = vmatpush.msra.mxu0 0.0
      %1250 = vmatpush.msra.mxu0 0.0
      %1251 = vmatpush.msra.mxu0 0.0
      %1252 = vmatpush.msra.mxu0 0.0
      %1253 = vmatpush.msra.mxu0 0.0
      %1254 = vmatpush.msra.mxu0 %v1238
      %1255 = vmatpush.msra.mxu0 %v62
      %1256 = vmatmul.f32.gmra.mxu0 %v744
      %v1257 = vpop.f32.mrf.mxu0
      %v1258 = vadd.f32 %v795, %v1257
      %1259 = vdwg.mxu0
      %v1260 = vadd.f32 %v821, %v144
      %v1261 = vadd.f32 %v844, %v145
      %v1262 = vadd.f32 %v867, %v146
      %v1263 = vadd.f32 %v890, %v147
      %v1264 = vadd.f32 %v913, %v148
      %v1265 = vadd.f32 %v936, %v149
      %v1266 = vadd.f32 %v959, %v150
      %v1267 = vadd.f32 %v982, %v151
      %v1268 = vadd.f32 %v1005, %v152
      %v1269 = vadd.f32 %v1028, %v153
      %v1270 = vadd.f32 %v1051, %v154
      %v1271 = vadd.f32 %v1074, %v155
      %v1272 = vadd.f32 %v1097, %v156
      %v1273 = vadd.f32 %v1120, %v157
      %v1274 = vadd.f32 %v1143, %v158
      %v1275 = vadd.f32 %v1166, %v159
      %v1276 = vadd.f32 %v1189, %v160
      %v1277 = vadd.f32 %v1212, %v161
      %v1278 = vadd.f32 %v1235, %v162
      %v1279 = vadd.f32 %v1258, %v163
      %v1280 = vxor.u32 %v1260, 2147483648
      %v1281 = vxor.u32 %v1261, 2147483648
      %v1282 = vxor.u32 %v1262, 2147483648
      %v1283 = vxor.u32 %v1263, 2147483648
      %v1284 = vxor.u32 %v1264, 2147483648
      %v1285 = vxor.u32 %v1265, 2147483648
      %v1286 = vxor.u32 %v1266, 2147483648
      %v1287 = vxor.u32 %v1267, 2147483648
      %v1288 = vxor.u32 %v1268, 2147483648
      %v1289 = vxor.u32 %v1269, 2147483648
      %v1290 = vxor.u32 %v1270, 2147483648
      %v1291 = vxor.u32 %v1271, 2147483648
      %v1292 = vxor.u32 %v1272, 2147483648
      %v1293 = vxor.u32 %v1273, 2147483648
      %v1294 = vxor.u32 %v1274, 2147483648
      %v1295 = vxor.u32 %v1275, 2147483648
      %v1296 = vxor.u32 %v1276, 2147483648
      %v1297 = vxor.u32 %v1277, 2147483648
      %v1298 = vxor.u32 %v1278, 2147483648
      %v1299 = vxor.u32 %v1279, 2147483648
      %v1300 = vmul.f32 %v1280, 1.442695
      %v1301 = vpow.pop %v1300
      %v1302 = vmul.f32 %v1281, 1.442695
      %v1303 = vpow.pop %v1302
      %v1304 = vmul.f32 %v1282, 1.442695
      %v1305 = vpow.pop %v1304
      %v1306 = vmul.f32 %v1283, 1.442695
      %v1307 = vpow.pop %v1306
      %v1308 = vmul.f32 %v1284, 1.442695
      %v1309 = vpow.pop %v1308
      %v1310 = vmul.f32 %v1285, 1.442695
      %v1311 = vpow.pop %v1310
      %v1312 = vmul.f32 %v1286, 1.442695
      %v1313 = vpow.pop %v1312
      %v1314 = vmul.f32 %v1287, 1.442695
      %v1315 = vpow.pop %v1314
      %v1316 = vmul.f32 %v1288, 1.442695
      %v1317 = vpow.pop %v1316
      %v1318 = vmul.f32 %v1289, 1.442695
      %v1319 = vpow.pop %v1318
      %v1320 = vmul.f32 %v1290, 1.442695
      %v1321 = vpow.pop %v1320
      %v1322 = vmul.f32 %v1291, 1.442695
      %v1323 = vpow.pop %v1322
      %v1324 = vmul.f32 %v1292, 1.442695
      %v1325 = vpow.pop %v1324
      %v1326 = vmul.f32 %v1293, 1.442695
      %v1327 = vpow.pop %v1326
      %v1328 = vmul.f32 %v1294, 1.442695
      %v1329 = vpow.pop %v1328
      %v1330 = vmul.f32 %v1295, 1.442695
      %v1331 = vpow.pop %v1330
      %v1332 = vmul.f32 %v1296, 1.442695
      %v1333 = vpow.pop %v1332
      %v1334 = vmul.f32 %v1297, 1.442695
      %v1335 = vpow.pop %v1334
      %v1336 = vmul.f32 %v1298, 1.442695
      %v1337 = vpow.pop %v1336
      %v1338 = vmul.f32 %v1299, 1.442695
      %v1339 = vpow.pop %v1338
      %v1340 = vadd.f32 %v1301, 1.0
      %v1341 = vadd.f32 %v1303, 1.0
      %v1342 = vadd.f32 %v1305, 1.0
      %v1343 = vadd.f32 %v1307, 1.0
      %v1344 = vadd.f32 %v1309, 1.0
      %v1345 = vadd.f32 %v1311, 1.0
      %v1346 = vadd.f32 %v1313, 1.0
      %v1347 = vadd.f32 %v1315, 1.0
      %v1348 = vadd.f32 %v1317, 1.0
      %v1349 = vadd.f32 %v1319, 1.0
      %v1350 = vadd.f32 %v1321, 1.0
      %v1351 = vadd.f32 %v1323, 1.0
      %v1352 = vadd.f32 %v1325, 1.0
      %v1353 = vadd.f32 %v1327, 1.0
      %v1354 = vadd.f32 %v1329, 1.0
      %v1355 = vadd.f32 %v1331, 1.0
      %v1356 = vadd.f32 %v1333, 1.0
      %v1357 = vadd.f32 %v1335, 1.0
      %v1358 = vadd.f32 %v1337, 1.0
      %v1359 = vadd.f32 %v1339, 1.0
      %v1360 = vrcp.pop %v1340
      %v1361 = vmul.f32 %v1340, %v1360
      %v1362 = vsub.f32 1.0, %v1361
      %v1363 = vmul.f32 %v1360, %v1362
      %v1364 = vadd.f32 %v1360, %v1363
      %vm1365 = vweird.f32 %v1340
      %vm1366 = vweird.f32 %v1360
      %vm1367 = vmor %vm1365, %vm1366
      %v1368 = vsel %vm1367, %v1360, %v1364
      %v1369 = vand.u32 2147483647, %v1340
      %vm1370 = vcmp.eq.f32.partialorder %v1369, 8.507059e+37
      %v1371 = vand.u32 %v1340, 2147483648
      %v1372 = vor.u32 1.1754944e-38, %v1371
      %v1373 = vsel %vm1370, %v1372, %v1368
      %v1374 = vmul.f32 1.0, %v1373
      %v1375 = vrcp.pop %v1341
      %v1376 = vmul.f32 %v1341, %v1375
      %v1377 = vsub.f32 1.0, %v1376
      %v1378 = vmul.f32 %v1375, %v1377
      %v1379 = vadd.f32 %v1375, %v1378
      %vm1380 = vweird.f32 %v1341
      %vm1381 = vweird.f32 %v1375
      %vm1382 = vmor %vm1380, %vm1381
      %v1383 = vsel %vm1382, %v1375, %v1379
      %v1384 = vand.u32 2147483647, %v1341
      %vm1385 = vcmp.eq.f32.partialorder %v1384, 8.507059e+37
      %v1386 = vand.u32 %v1341, 2147483648
      %v1387 = vor.u32 1.1754944e-38, %v1386
      %v1388 = vsel %vm1385, %v1387, %v1383
      %v1389 = vmul.f32 1.0, %v1388
      %v1390 = vrcp.pop %v1342
      %v1391 = vmul.f32 %v1342, %v1390
      %v1392 = vsub.f32 1.0, %v1391
      %v1393 = vmul.f32 %v1390, %v1392
      %v1394 = vadd.f32 %v1390, %v1393
      %vm1395 = vweird.f32 %v1342
      %vm1396 = vweird.f32 %v1390
      %vm1397 = vmor %vm1395, %vm1396
      %v1398 = vsel %vm1397, %v1390, %v1394
      %v1399 = vand.u32 2147483647, %v1342
      %vm1400 = vcmp.eq.f32.partialorder %v1399, 8.507059e+37
      %v1401 = vand.u32 %v1342, 2147483648
      %v1402 = vor.u32 1.1754944e-38, %v1401
      %v1403 = vsel %vm1400, %v1402, %v1398
      %v1404 = vmul.f32 1.0, %v1403
      %v1405 = vrcp.pop %v1343
      %v1406 = vmul.f32 %v1343, %v1405
      %v1407 = vsub.f32 1.0, %v1406
      %v1408 = vmul.f32 %v1405, %v1407
      %v1409 = vadd.f32 %v1405, %v1408
      %vm1410 = vweird.f32 %v1343
      %vm1411 = vweird.f32 %v1405
      %vm1412 = vmor %vm1410, %vm1411
      %v1413 = vsel %vm1412, %v1405, %v1409
      %v1414 = vand.u32 2147483647, %v1343
      %vm1415 = vcmp.eq.f32.partialorder %v1414, 8.507059e+37
      %v1416 = vand.u32 %v1343, 2147483648
      %v1417 = vor.u32 1.1754944e-38, %v1416
      %v1418 = vsel %vm1415, %v1417, %v1413
      %v1419 = vmul.f32 1.0, %v1418
      %v1420 = vrcp.pop %v1344
      %v1421 = vmul.f32 %v1344, %v1420
      %v1422 = vsub.f32 1.0, %v1421
      %v1423 = vmul.f32 %v1420, %v1422
      %v1424 = vadd.f32 %v1420, %v1423
      %vm1425 = vweird.f32 %v1344
      %vm1426 = vweird.f32 %v1420
      %vm1427 = vmor %vm1425, %vm1426
      %v1428 = vsel %vm1427, %v1420, %v1424
      %v1429 = vand.u32 2147483647, %v1344
      %vm1430 = vcmp.eq.f32.partialorder %v1429, 8.507059e+37
      %v1431 = vand.u32 %v1344, 2147483648
      %v1432 = vor.u32 1.1754944e-38, %v1431
      %v1433 = vsel %vm1430, %v1432, %v1428
      %v1434 = vmul.f32 1.0, %v1433
      %v1435 = vrcp.pop %v1345
      %v1436 = vmul.f32 %v1345, %v1435
      %v1437 = vsub.f32 1.0, %v1436
      %v1438 = vmul.f32 %v1435, %v1437
      %v1439 = vadd.f32 %v1435, %v1438
      %vm1440 = vweird.f32 %v1345
      %vm1441 = vweird.f32 %v1435
      %vm1442 = vmor %vm1440, %vm1441
      %v1443 = vsel %vm1442, %v1435, %v1439
      %v1444 = vand.u32 2147483647, %v1345
      %vm1445 = vcmp.eq.f32.partialorder %v1444, 8.507059e+37
      %v1446 = vand.u32 %v1345, 2147483648
      %v1447 = vor.u32 1.1754944e-38, %v1446
      %v1448 = vsel %vm1445, %v1447, %v1443
      %v1449 = vmul.f32 1.0, %v1448
      %v1450 = vrcp.pop %v1346
      %v1451 = vmul.f32 %v1346, %v1450
      %v1452 = vsub.f32 1.0, %v1451
      %v1453 = vmul.f32 %v1450, %v1452
      %v1454 = vadd.f32 %v1450, %v1453
      %vm1455 = vweird.f32 %v1346
      %vm1456 = vweird.f32 %v1450
      %vm1457 = vmor %vm1455, %vm1456
      %v1458 = vsel %vm1457, %v1450, %v1454
      %v1459 = vand.u32 2147483647, %v1346
      %vm1460 = vcmp.eq.f32.partialorder %v1459, 8.507059e+37
      %v1461 = vand.u32 %v1346, 2147483648
      %v1462 = vor.u32 1.1754944e-38, %v1461
      %v1463 = vsel %vm1460, %v1462, %v1458
      %v1464 = vmul.f32 1.0, %v1463
      %v1465 = vrcp.pop %v1347
      %v1466 = vmul.f32 %v1347, %v1465
      %v1467 = vsub.f32 1.0, %v1466
      %v1468 = vmul.f32 %v1465, %v1467
      %v1469 = vadd.f32 %v1465, %v1468
      %vm1470 = vweird.f32 %v1347
      %vm1471 = vweird.f32 %v1465
      %vm1472 = vmor %vm1470, %vm1471
      %v1473 = vsel %vm1472, %v1465, %v1469
      %v1474 = vand.u32 2147483647, %v1347
      %vm1475 = vcmp.eq.f32.partialorder %v1474, 8.507059e+37
      %v1476 = vand.u32 %v1347, 2147483648
      %v1477 = vor.u32 1.1754944e-38, %v1476
      %v1478 = vsel %vm1475, %v1477, %v1473
      %v1479 = vmul.f32 1.0, %v1478
      %v1480 = vrcp.pop %v1348
      %v1481 = vmul.f32 %v1348, %v1480
      %v1482 = vsub.f32 1.0, %v1481
      %v1483 = vmul.f32 %v1480, %v1482
      %v1484 = vadd.f32 %v1480, %v1483
      %vm1485 = vweird.f32 %v1348
      %vm1486 = vweird.f32 %v1480
      %vm1487 = vmor %vm1485, %vm1486
      %v1488 = vsel %vm1487, %v1480, %v1484
      %v1489 = vand.u32 2147483647, %v1348
      %vm1490 = vcmp.eq.f32.partialorder %v1489, 8.507059e+37
      %v1491 = vand.u32 %v1348, 2147483648
      %v1492 = vor.u32 1.1754944e-38, %v1491
      %v1493 = vsel %vm1490, %v1492, %v1488
      %v1494 = vmul.f32 1.0, %v1493
      %v1495 = vrcp.pop %v1349
      %v1496 = vmul.f32 %v1349, %v1495
      %v1497 = vsub.f32 1.0, %v1496
      %v1498 = vmul.f32 %v1495, %v1497
      %v1499 = vadd.f32 %v1495, %v1498
      %vm1500 = vweird.f32 %v1349
      %vm1501 = vweird.f32 %v1495
      %vm1502 = vmor %vm1500, %vm1501
      %v1503 = vsel %vm1502, %v1495, %v1499
      %v1504 = vand.u32 2147483647, %v1349
      %vm1505 = vcmp.eq.f32.partialorder %v1504, 8.507059e+37
      %v1506 = vand.u32 %v1349, 2147483648
      %v1507 = vor.u32 1.1754944e-38, %v1506
      %v1508 = vsel %vm1505, %v1507, %v1503
      %v1509 = vmul.f32 1.0, %v1508
      %v1510 = vrcp.pop %v1350
      %v1511 = vmul.f32 %v1350, %v1510
      %v1512 = vsub.f32 1.0, %v1511
      %v1513 = vmul.f32 %v1510, %v1512
      %v1514 = vadd.f32 %v1510, %v1513
      %vm1515 = vweird.f32 %v1350
      %vm1516 = vweird.f32 %v1510
      %vm1517 = vmor %vm1515, %vm1516
      %v1518 = vsel %vm1517, %v1510, %v1514
      %v1519 = vand.u32 2147483647, %v1350
      %vm1520 = vcmp.eq.f32.partialorder %v1519, 8.507059e+37
      %v1521 = vand.u32 %v1350, 2147483648
      %v1522 = vor.u32 1.1754944e-38, %v1521
      %v1523 = vsel %vm1520, %v1522, %v1518
      %v1524 = vmul.f32 1.0, %v1523
      %v1525 = vrcp.pop %v1351
      %v1526 = vmul.f32 %v1351, %v1525
      %v1527 = vsub.f32 1.0, %v1526
      %v1528 = vmul.f32 %v1525, %v1527
      %v1529 = vadd.f32 %v1525, %v1528
      %vm1530 = vweird.f32 %v1351
      %vm1531 = vweird.f32 %v1525
      %vm1532 = vmor %vm1530, %vm1531
      %v1533 = vsel %vm1532, %v1525, %v1529
      %v1534 = vand.u32 2147483647, %v1351
      %vm1535 = vcmp.eq.f32.partialorder %v1534, 8.507059e+37
      %v1536 = vand.u32 %v1351, 2147483648
      %v1537 = vor.u32 1.1754944e-38, %v1536
      %v1538 = vsel %vm1535, %v1537, %v1533
      %v1539 = vmul.f32 1.0, %v1538
      %v1540 = vrcp.pop %v1352
      %v1541 = vmul.f32 %v1352, %v1540
      %v1542 = vsub.f32 1.0, %v1541
      %v1543 = vmul.f32 %v1540, %v1542
      %v1544 = vadd.f32 %v1540, %v1543
      %vm1545 = vweird.f32 %v1352
      %vm1546 = vweird.f32 %v1540
      %vm1547 = vmor %vm1545, %vm1546
      %v1548 = vsel %vm1547, %v1540, %v1544
      %v1549 = vand.u32 2147483647, %v1352
      %vm1550 = vcmp.eq.f32.partialorder %v1549, 8.507059e+37
      %v1551 = vand.u32 %v1352, 2147483648
      %v1552 = vor.u32 1.1754944e-38, %v1551
      %v1553 = vsel %vm1550, %v1552, %v1548
      %v1554 = vmul.f32 1.0, %v1553
      %v1555 = vrcp.pop %v1353
      %v1556 = vmul.f32 %v1353, %v1555
      %v1557 = vsub.f32 1.0, %v1556
      %v1558 = vmul.f32 %v1555, %v1557
      %v1559 = vadd.f32 %v1555, %v1558
      %vm1560 = vweird.f32 %v1353
      %vm1561 = vweird.f32 %v1555
      %vm1562 = vmor %vm1560, %vm1561
      %v1563 = vsel %vm1562, %v1555, %v1559
      %v1564 = vand.u32 2147483647, %v1353
      %vm1565 = vcmp.eq.f32.partialorder %v1564, 8.507059e+37
      %v1566 = vand.u32 %v1353, 2147483648
      %v1567 = vor.u32 1.1754944e-38, %v1566
      %v1568 = vsel %vm1565, %v1567, %v1563
      %v1569 = vmul.f32 1.0, %v1568
      %v1570 = vrcp.pop %v1354
      %v1571 = vmul.f32 %v1354, %v1570
      %v1572 = vsub.f32 1.0, %v1571
      %v1573 = vmul.f32 %v1570, %v1572
      %v1574 = vadd.f32 %v1570, %v1573
      %vm1575 = vweird.f32 %v1354
      %vm1576 = vweird.f32 %v1570
      %vm1577 = vmor %vm1575, %vm1576
      %v1578 = vsel %vm1577, %v1570, %v1574
      %v1579 = vand.u32 2147483647, %v1354
      %vm1580 = vcmp.eq.f32.partialorder %v1579, 8.507059e+37
      %v1581 = vand.u32 %v1354, 2147483648
      %v1582 = vor.u32 1.1754944e-38, %v1581
      %v1583 = vsel %vm1580, %v1582, %v1578
      %v1584 = vmul.f32 1.0, %v1583
      %v1585 = vrcp.pop %v1355
      %v1586 = vmul.f32 %v1355, %v1585
      %v1587 = vsub.f32 1.0, %v1586
      %v1588 = vmul.f32 %v1585, %v1587
      %v1589 = vadd.f32 %v1585, %v1588
      %vm1590 = vweird.f32 %v1355
      %vm1591 = vweird.f32 %v1585
      %vm1592 = vmor %vm1590, %vm1591
      %v1593 = vsel %vm1592, %v1585, %v1589
      %v1594 = vand.u32 2147483647, %v1355
      %vm1595 = vcmp.eq.f32.partialorder %v1594, 8.507059e+37
      %v1596 = vand.u32 %v1355, 2147483648
      %v1597 = vor.u32 1.1754944e-38, %v1596
      %v1598 = vsel %vm1595, %v1597, %v1593
      %v1599 = vmul.f32 1.0, %v1598
      %v1600 = vrcp.pop %v1356
      %v1601 = vmul.f32 %v1356, %v1600
      %v1602 = vsub.f32 1.0, %v1601
      %v1603 = vmul.f32 %v1600, %v1602
      %v1604 = vadd.f32 %v1600, %v1603
      %vm1605 = vweird.f32 %v1356
      %vm1606 = vweird.f32 %v1600
      %vm1607 = vmor %vm1605, %vm1606
      %v1608 = vsel %vm1607, %v1600, %v1604
      %v1609 = vand.u32 2147483647, %v1356
      %vm1610 = vcmp.eq.f32.partialorder %v1609, 8.507059e+37
      %v1611 = vand.u32 %v1356, 2147483648
      %v1612 = vor.u32 1.1754944e-38, %v1611
      %v1613 = vsel %vm1610, %v1612, %v1608
      %v1614 = vmul.f32 1.0, %v1613
      %v1615 = vrcp.pop %v1357
      %v1616 = vmul.f32 %v1357, %v1615
      %v1617 = vsub.f32 1.0, %v1616
      %v1618 = vmul.f32 %v1615, %v1617
      %v1619 = vadd.f32 %v1615, %v1618
      %vm1620 = vweird.f32 %v1357
      %vm1621 = vweird.f32 %v1615
      %vm1622 = vmor %vm1620, %vm1621
      %v1623 = vsel %vm1622, %v1615, %v1619
      %v1624 = vand.u32 2147483647, %v1357
      %vm1625 = vcmp.eq.f32.partialorder %v1624, 8.507059e+37
      %v1626 = vand.u32 %v1357, 2147483648
      %v1627 = vor.u32 1.1754944e-38, %v1626
      %v1628 = vsel %vm1625, %v1627, %v1623
      %v1629 = vmul.f32 1.0, %v1628
      %v1630 = vrcp.pop %v1358
      %v1631 = vmul.f32 %v1358, %v1630
      %v1632 = vsub.f32 1.0, %v1631
      %v1633 = vmul.f32 %v1630, %v1632
      %v1634 = vadd.f32 %v1630, %v1633
      %vm1635 = vweird.f32 %v1358
      %vm1636 = vweird.f32 %v1630
      %vm1637 = vmor %vm1635, %vm1636
      %v1638 = vsel %vm1637, %v1630, %v1634
      %v1639 = vand.u32 2147483647, %v1358
      %vm1640 = vcmp.eq.f32.partialorder %v1639, 8.507059e+37
      %v1641 = vand.u32 %v1358, 2147483648
      %v1642 = vor.u32 1.1754944e-38, %v1641
      %v1643 = vsel %vm1640, %v1642, %v1638
      %v1644 = vmul.f32 1.0, %v1643
      %v1645 = vrcp.pop %v1359
      %v1646 = vmul.f32 %v1359, %v1645
      %v1647 = vsub.f32 1.0, %v1646
      %v1648 = vmul.f32 %v1645, %v1647
      %v1649 = vadd.f32 %v1645, %v1648
      %vm1650 = vweird.f32 %v1359
      %vm1651 = vweird.f32 %v1645
      %vm1652 = vmor %vm1650, %vm1651
      %v1653 = vsel %vm1652, %v1645, %v1649
      %v1654 = vand.u32 2147483647, %v1359
      %vm1655 = vcmp.eq.f32.partialorder %v1654, 8.507059e+37
      %v1656 = vand.u32 %v1359, 2147483648
      %v1657 = vor.u32 1.1754944e-38, %v1656
      %v1658 = vsel %vm1655, %v1657, %v1653
      %v1659 = vmul.f32 1.0, %v1658
      %v1660 = vtanh.pop %v1260
      %v1661 = vtanh.pop %v1261
      %v1662 = vtanh.pop %v1262
      %v1663 = vtanh.pop %v1263
      %v1664 = vtanh.pop %v1264
      %v1665 = vtanh.pop %v1265
      %v1666 = vtanh.pop %v1266
      %v1667 = vtanh.pop %v1267
      %v1668 = vtanh.pop %v1268
      %v1669 = vtanh.pop %v1269
      %v1670 = vtanh.pop %v1270
      %v1671 = vtanh.pop %v1271
      %v1672 = vtanh.pop %v1272
      %v1673 = vtanh.pop %v1273
      %v1674 = vtanh.pop %v1274
      %v1675 = vtanh.pop %v1275
      %v1676 = vtanh.pop %v1276
      %v1677 = vtanh.pop %v1277
      %v1678 = vtanh.pop %v1278
      %v1679 = vtanh.pop %v1279
      %v1680 = vmul.f32 %v1374, %v210
      %v1681 = vmul.f32 %v1389, %v211
      %v1682 = vmul.f32 %v1404, %v212
      %v1683 = vmul.f32 %v1419, %v213
      %v1684 = vmul.f32 %v1434, %v214
      %v1685 = vmul.f32 %v1449, %v215
      %v1686 = vmul.f32 %v1464, %v216
      %v1687 = vmul.f32 %v1479, %v217
      %v1688 = vmul.f32 %v1494, %v218
      %v1689 = vmul.f32 %v1509, %v219
      %v1690 = vmul.f32 %v1524, %v220
      %v1691 = vmul.f32 %v1539, %v221
      %v1692 = vmul.f32 %v1554, %v222
      %v1693 = vmul.f32 %v1569, %v223
      %v1694 = vmul.f32 %v1584, %v224
      %v1695 = vmul.f32 %v1599, %v225
      %v1696 = vmul.f32 %v1614, %v226
      %v1697 = vmul.f32 %v1629, %v227
      %v1698 = vmul.f32 %v1644, %v228
      %v1699 = vmul.f32 %v1659, %v229
      %1720 = vrot.lane.b32.xlu0 %v1660, 98
      %v1721 = vpop.permute.xlu0 %1720
      %1722 = vrot.lane.b32.xlu0 %v1661, 98
      %v1723 = vpop.permute.xlu0 %1722
      %1724 = vrot.lane.b32.xlu0 %v1662, 98
      %v1725 = vpop.permute.xlu0 %1724
      %1726 = vrot.lane.b32.xlu0 %v1663, 98
      %v1727 = vpop.permute.xlu0 %1726
      %1728 = vrot.lane.b32.xlu0 %v1664, 98
      %v1729 = vpop.permute.xlu0 %1728
      %1730 = vrot.lane.b32.xlu0 %v1665, 98
      %v1731 = vpop.permute.xlu0 %1730
      %1732 = vrot.lane.b32.xlu0 %v1666, 98
      %v1733 = vpop.permute.xlu0 %1732
      %1734 = vrot.lane.b32.xlu0 %v1667, 98
      %v1735 = vpop.permute.xlu0 %1734
      %1736 = vrot.lane.b32.xlu0 %v1668, 98
      %v1737 = vpop.permute.xlu0 %1736
      %1738 = vrot.lane.b32.xlu0 %v1669, 98
      %v1739 = vpop.permute.xlu0 %1738
      %1740 = vrot.lane.b32.xlu0 %v1670, 98
      %v1741 = vpop.permute.xlu0 %1740
      %1742 = vrot.lane.b32.xlu0 %v1671, 98
      %v1743 = vpop.permute.xlu0 %1742
      %1744 = vrot.lane.b32.xlu0 %v1672, 98
      %v1745 = vpop.permute.xlu0 %1744
      %1746 = vrot.lane.b32.xlu0 %v1673, 98
      %v1747 = vpop.permute.xlu0 %1746
      %1748 = vrot.lane.b32.xlu0 %v1674, 98
      %v1749 = vpop.permute.xlu0 %1748
      %1750 = vrot.lane.b32.xlu0 %v1675, 98
      %v1751 = vpop.permute.xlu0 %1750
      %1752 = vrot.lane.b32.xlu0 %v1676, 98
      %v1753 = vpop.permute.xlu0 %1752
      %1754 = vrot.lane.b32.xlu0 %v1677, 98
      %v1755 = vpop.permute.xlu0 %1754
      %1756 = vrot.lane.b32.xlu0 %v1678, 98
      %v1757 = vpop.permute.xlu0 %1756
      %1758 = vrot.lane.b32.xlu0 %v1679, 98
      %v1759 = vpop.permute.xlu0 %1758
      %v1780 = vmul.f32 %v1374, %v1721
      %v1781 = vmul.f32 %v1389, %v1723
      %v1782 = vmul.f32 %v1404, %v1725
      %v1783 = vmul.f32 %v1419, %v1727
      %v1784 = vmul.f32 %v1434, %v1729
      %v1785 = vmul.f32 %v1449, %v1731
      %v1786 = vmul.f32 %v1464, %v1733
      %v1787 = vmul.f32 %v1479, %v1735
      %v1788 = vmul.f32 %v1494, %v1737
      %v1789 = vmul.f32 %v1509, %v1739
      %v1790 = vmul.f32 %v1524, %v1741
      %v1791 = vmul.f32 %v1539, %v1743
      %v1792 = vmul.f32 %v1554, %v1745
      %v1793 = vmul.f32 %v1569, %v1747
      %v1794 = vmul.f32 %v1584, %v1749
      %v1795 = vmul.f32 %v1599, %v1751
      %v1796 = vmul.f32 %v1614, %v1753
      %v1797 = vmul.f32 %v1629, %v1755
      %v1798 = vmul.f32 %v1644, %v1757
      %v1799 = vmul.f32 %v1659, %v1759
      %1820 = vrot.lane.b32.xlu0 %v1780, 10
      %v1821 = vpop.permute.xlu0 %1820
      %1822 = vrot.lane.b32.xlu0 %v1781, 10
      %v1823 = vpop.permute.xlu0 %1822
      %1824 = vrot.lane.b32.xlu0 %v1782, 10
      %v1825 = vpop.permute.xlu0 %1824
      %1826 = vrot.lane.b32.xlu0 %v1783, 10
      %v1827 = vpop.permute.xlu0 %1826
      %1828 = vrot.lane.b32.xlu0 %v1784, 10
      %v1829 = vpop.permute.xlu0 %1828
      %1830 = vrot.lane.b32.xlu0 %v1785, 10
      %v1831 = vpop.permute.xlu0 %1830
      %1832 = vrot.lane.b32.xlu0 %v1786, 10
      %v1833 = vpop.permute.xlu0 %1832
      %1834 = vrot.lane.b32.xlu0 %v1787, 10
      %v1835 = vpop.permute.xlu0 %1834
      %1836 = vrot.lane.b32.xlu0 %v1788, 10
      %v1837 = vpop.permute.xlu0 %1836
      %1838 = vrot.lane.b32.xlu0 %v1789, 10
      %v1839 = vpop.permute.xlu0 %1838
      %1840 = vrot.lane.b32.xlu0 %v1790, 10
      %v1841 = vpop.permute.xlu0 %1840
      %1842 = vrot.lane.b32.xlu0 %v1791, 10
      %v1843 = vpop.permute.xlu0 %1842
      %1844 = vrot.lane.b32.xlu0 %v1792, 10
      %v1845 = vpop.permute.xlu0 %1844
      %1846 = vrot.lane.b32.xlu0 %v1793, 10
      %v1847 = vpop.permute.xlu0 %1846
      %1848 = vrot.lane.b32.xlu0 %v1794, 10
      %v1849 = vpop.permute.xlu0 %1848
      %1850 = vrot.lane.b32.xlu0 %v1795, 10
      %v1851 = vpop.permute.xlu0 %1850
      %1852 = vrot.lane.b32.xlu0 %v1796, 10
      %v1853 = vpop.permute.xlu0 %1852
      %1854 = vrot.lane.b32.xlu0 %v1797, 10
      %v1855 = vpop.permute.xlu0 %1854
      %1856 = vrot.lane.b32.xlu0 %v1798, 10
      %v1857 = vpop.permute.xlu0 %1856
      %1858 = vrot.lane.b32.xlu0 %v1799, 10
      %v1859 = vpop.permute.xlu0 %1858
      %v1880 = vadd.f32 %v1680, %v1821
      %v1881 = vadd.f32 %v1681, %v1823
      %v1882 = vadd.f32 %v1682, %v1825
      %v1883 = vadd.f32 %v1683, %v1827
      %v1884 = vadd.f32 %v1684, %v1829
      %v1885 = vadd.f32 %v1685, %v1831
      %v1886 = vadd.f32 %v1686, %v1833
      %v1887 = vadd.f32 %v1687, %v1835
      %v1888 = vadd.f32 %v1688, %v1837
      %v1889 = vadd.f32 %v1689, %v1839
      %v1890 = vadd.f32 %v1690, %v1841
      %v1891 = vadd.f32 %v1691, %v1843
      %v1892 = vadd.f32 %v1692, %v1845
      %v1893 = vadd.f32 %v1693, %v1847
      %v1894 = vadd.f32 %v1694, %v1849
      %v1895 = vadd.f32 %v1695, %v1851
      %v1896 = vadd.f32 %v1696, %v1853
      %v1897 = vadd.f32 %v1697, %v1855
      %v1898 = vadd.f32 %v1698, %v1857
      %v1899 = vadd.f32 %v1699, %v1859
      %v1900 = vtanh.pop %v1880
      %v1901 = vtanh.pop %v1881
      %v1902 = vtanh.pop %v1882
      %v1903 = vtanh.pop %v1883
      %v1904 = vtanh.pop %v1884
      %v1905 = vtanh.pop %v1885
      %v1906 = vtanh.pop %v1886
      %v1907 = vtanh.pop %v1887
      %v1908 = vtanh.pop %v1888
      %v1909 = vtanh.pop %v1889
      %v1910 = vtanh.pop %v1890
      %v1911 = vtanh.pop %v1891
      %v1912 = vtanh.pop %v1892
      %v1913 = vtanh.pop %v1893
      %v1914 = vtanh.pop %v1894
      %v1915 = vtanh.pop %v1895
      %v1916 = vtanh.pop %v1896
      %v1917 = vtanh.pop %v1897
      %v1918 = vtanh.pop %v1898
      %v1919 = vtanh.pop %v1899
      %1940 = vrot.lane.b32.xlu0 %v1900, 10
      %v1941 = vpop.permute.xlu0 %1940
      %1942 = vrot.lane.b32.xlu0 %v1901, 10
      %v1943 = vpop.permute.xlu0 %1942
      %1944 = vrot.lane.b32.xlu0 %v1902, 10
      %v1945 = vpop.permute.xlu0 %1944
      %1946 = vrot.lane.b32.xlu0 %v1903, 10
      %v1947 = vpop.permute.xlu0 %1946
      %1948 = vrot.lane.b32.xlu0 %v1904, 10
      %v1949 = vpop.permute.xlu0 %1948
      %1950 = vrot.lane.b32.xlu0 %v1905, 10
      %v1951 = vpop.permute.xlu0 %1950
      %1952 = vrot.lane.b32.xlu0 %v1906, 10
      %v1953 = vpop.permute.xlu0 %1952
      %1954 = vrot.lane.b32.xlu0 %v1907, 10
      %v1955 = vpop.permute.xlu0 %1954
      %1956 = vrot.lane.b32.xlu0 %v1908, 10
      %v1957 = vpop.permute.xlu0 %1956
      %1958 = vrot.lane.b32.xlu0 %v1909, 10
      %v1959 = vpop.permute.xlu0 %1958
      %1960 = vrot.lane.b32.xlu0 %v1910, 10
      %v1961 = vpop.permute.xlu0 %1960
      %1962 = vrot.lane.b32.xlu0 %v1911, 10
      %v1963 = vpop.permute.xlu0 %1962
      %1964 = vrot.lane.b32.xlu0 %v1912, 10
      %v1965 = vpop.permute.xlu0 %1964
      %1966 = vrot.lane.b32.xlu0 %v1913, 10
      %v1967 = vpop.permute.xlu0 %1966
      %1968 = vrot.lane.b32.xlu0 %v1914, 10
      %v1969 = vpop.permute.xlu0 %1968
      %1970 = vrot.lane.b32.xlu0 %v1915, 10
      %v1971 = vpop.permute.xlu0 %1970
      %1972 = vrot.lane.b32.xlu0 %v1916, 10
      %v1973 = vpop.permute.xlu0 %1972
      %1974 = vrot.lane.b32.xlu0 %v1917, 10
      %v1975 = vpop.permute.xlu0 %1974
      %1976 = vrot.lane.b32.xlu0 %v1918, 10
      %v1977 = vpop.permute.xlu0 %1976
      %1978 = vrot.lane.b32.xlu0 %v1919, 10
      %v1979 = vpop.permute.xlu0 %1978
      %v2000 = vmul.f32 %v1374, %v1941
      %v2001 = vmul.f32 %v1389, %v1943
      %v2002 = vmul.f32 %v1404, %v1945
      %v2003 = vmul.f32 %v1419, %v1947
      %v2004 = vmul.f32 %v1434, %v1949
      %v2005 = vmul.f32 %v1449, %v1951
      %v2006 = vmul.f32 %v1464, %v1953
      %v2007 = vmul.f32 %v1479, %v1955
      %v2008 = vmul.f32 %v1494, %v1957
      %v2009 = vmul.f32 %v1509, %v1959
      %v2010 = vmul.f32 %v1524, %v1961
      %v2011 = vmul.f32 %v1539, %v1963
      %v2012 = vmul.f32 %v1554, %v1965
      %v2013 = vmul.f32 %v1569, %v1967
      %v2014 = vmul.f32 %v1584, %v1969
      %v2015 = vmul.f32 %v1599, %v1971
      %v2016 = vmul.f32 %v1614, %v1973
      %v2017 = vmul.f32 %v1629, %v1975
      %v2018 = vmul.f32 %v1644, %v1977
      %v2019 = vmul.f32 %v1659, %v1979
      %v2020 = vstv %s185
      %v2021 = vsub.s32 %v2020, 1
      %v2022 = vsub.s32 %v2020, 2
      %v2023 = vsub.s32 %v2020, 3
      %v2024 = vsub.s32 %v2020, 4
      %v2025 = vsub.s32 %v2020, 5
      %v2026 = vsub.s32 %v2020, 6
      %v2027 = vsub.s32 %v2020, 7
      %v2028 = vsub.s32 %v2020, 8
      %v2029 = vsub.s32 %v2020, 9
      %v2030 = vsub.s32 %v2020, 10
      %v2031 = vsub.s32 %v2020, 11
      %v2032 = vsub.s32 %v2020, 12
      %v2033 = vsub.s32 %v2020, 13
      %v2034 = vsub.s32 %v2020, 14
      %v2035 = vsub.s32 %v2020, 15
      %v2036 = vsub.s32 %v2020, 16
      %v2037 = vsub.s32 %v2020, 17
      %v2038 = vsub.s32 %v2020, 18
      %v2039 = vsub.s32 %v2020, 19
      %vm2040 = vcmp.ge.s32.totalorder %v2020, 0
      %vm2041 = vcmp.ge.s32.totalorder %v2021, 0
      %vm2042 = vcmp.ge.s32.totalorder %v2022, 0
      %vm2043 = vcmp.ge.s32.totalorder %v2023, 0
      %vm2044 = vcmp.ge.s32.totalorder %v2024, 0
      %vm2045 = vcmp.ge.s32.totalorder %v2025, 0
      %vm2046 = vcmp.ge.s32.totalorder %v2026, 0
      %vm2047 = vcmp.ge.s32.totalorder %v2027, 0
      %vm2048 = vcmp.ge.s32.totalorder %v2028, 0
      %vm2049 = vcmp.ge.s32.totalorder %v2029, 0
      %vm2050 = vcmp.ge.s32.totalorder %v2030, 0
      %vm2051 = vcmp.ge.s32.totalorder %v2031, 0
      %vm2052 = vcmp.ge.s32.totalorder %v2032, 0
      %vm2053 = vcmp.ge.s32.totalorder %v2033, 0
      %vm2054 = vcmp.ge.s32.totalorder %v2034, 0
      %vm2055 = vcmp.ge.s32.totalorder %v2035, 0
      %vm2056 = vcmp.ge.s32.totalorder %v2036, 0
      %vm2057 = vcmp.ge.s32.totalorder %v2037, 0
      %vm2058 = vcmp.ge.s32.totalorder %v2038, 0
      %vm2059 = vcmp.ge.s32.totalorder %v2039, 0
      %vm2060 = vcmp.lt.s32.totalorder %v2020, 8
      %vm2061 = vcmp.lt.s32.totalorder %v2021, 8
      %vm2062 = vcmp.lt.s32.totalorder %v2022, 8
      %vm2063 = vcmp.lt.s32.totalorder %v2023, 8
      %vm2064 = vcmp.lt.s32.totalorder %v2024, 8
      %vm2065 = vcmp.lt.s32.totalorder %v2025, 8
      %vm2066 = vcmp.lt.s32.totalorder %v2026, 8
      %vm2067 = vcmp.lt.s32.totalorder %v2027, 8
      %vm2068 = vcmp.lt.s32.totalorder %v2028, 8
      %vm2069 = vcmp.lt.s32.totalorder %v2029, 8
      %vm2070 = vcmp.lt.s32.totalorder %v2030, 8
      %vm2071 = vcmp.lt.s32.totalorder %v2031, 8
      %vm2072 = vcmp.lt.s32.totalorder %v2032, 8
      %vm2073 = vcmp.lt.s32.totalorder %v2033, 8
      %vm2074 = vcmp.lt.s32.totalorder %v2034, 8
      %vm2075 = vcmp.lt.s32.totalorder %v2035, 8
      %vm2076 = vcmp.lt.s32.totalorder %v2036, 8
      %vm2077 = vcmp.lt.s32.totalorder %v2037, 8
      %vm2078 = vcmp.lt.s32.totalorder %v2038, 8
      %vm2079 = vcmp.lt.s32.totalorder %v2039, 8
      %vm2080 = vmand %vm2040, %vm2060
      %vm2081 = vmand %vm2041, %vm2061
      %vm2082 = vmand %vm2042, %vm2062
      %vm2083 = vmand %vm2043, %vm2063
      %vm2084 = vmand %vm2044, %vm2064
      %vm2085 = vmand %vm2045, %vm2065
      %vm2086 = vmand %vm2046, %vm2066
      %vm2087 = vmand %vm2047, %vm2067
      %vm2088 = vmand %vm2048, %vm2068
      %vm2089 = vmand %vm2049, %vm2069
      %vm2090 = vmand %vm2050, %vm2070
      %vm2091 = vmand %vm2051, %vm2071
      %vm2092 = vmand %vm2052, %vm2072
      %vm2093 = vmand %vm2053, %vm2073
      %vm2094 = vmand %vm2054, %vm2074
      %vm2095 = vmand %vm2055, %vm2075
      %vm2096 = vmand %vm2056, %vm2076
      %vm2097 = vmand %vm2057, %vm2077
      %vm2098 = vmand %vm2058, %vm2078
      %vm2099 = vmand %vm2059, %vm2079
      %v2100 = vsel %vm2080, %v2000, %v190
      %v2101 = vsel %vm2081, %v2001, %v191
      %v2102 = vsel %vm2082, %v2002, %v192
      %v2103 = vsel %vm2083, %v2003, %v193
      %v2104 = vsel %vm2084, %v2004, %v194
      %v2105 = vsel %vm2085, %v2005, %v195
      %v2106 = vsel %vm2086, %v2006, %v196
      %v2107 = vsel %vm2087, %v2007, %v197
      %v2108 = vsel %vm2088, %v2008, %v198
      %v2109 = vsel %vm2089, %v2009, %v199
      %v2110 = vsel %vm2090, %v2010, %v200
      %v2111 = vsel %vm2091, %v2011, %v201
      %v2112 = vsel %vm2092, %v2012, %v202
      %v2113 = vsel %vm2093, %v2013, %v203
      %v2114 = vsel %vm2094, %v2014, %v204
      %v2115 = vsel %vm2095, %v2015, %v205
      %v2116 = vsel %vm2096, %v2016, %v206
      %v2117 = vsel %vm2097, %v2017, %v207
      %v2118 = vsel %vm2098, %v2018, %v208
      %v2119 = vsel %vm2099, %v2019, %v209
      %v2120 = vsel %vm2080, %v1880, %v210
      %v2121 = vsel %vm2081, %v1881, %v211
      %v2122 = vsel %vm2082, %v1882, %v212
      %v2123 = vsel %vm2083, %v1883, %v213
      %v2124 = vsel %vm2084, %v1884, %v214
      %v2125 = vsel %vm2085, %v1885, %v215
      %v2126 = vsel %vm2086, %v1886, %v216
      %v2127 = vsel %vm2087, %v1887, %v217
      %v2128 = vsel %vm2088, %v1888, %v218
      %v2129 = vsel %vm2089, %v1889, %v219
      %v2130 = vsel %vm2090, %v1890, %v220
      %v2131 = vsel %vm2091, %v1891, %v221
      %v2132 = vsel %vm2092, %v1892, %v222
      %v2133 = vsel %vm2093, %v1893, %v223
      %v2134 = vsel %vm2094, %v1894, %v224
      %v2135 = vsel %vm2095, %v1895, %v225
      %v2136 = vsel %vm2096, %v1896, %v226
      %v2137 = vsel %vm2097, %v1897, %v227
      %v2138 = vsel %vm2098, %v1898, %v228
      %v2139 = vsel %vm2099, %v1899, %v229
    $region30: #{tpu_custom_call.1} parent=1 // loop_footer
      %s189 = sadd.s32 1, %s185
    $region31: #{tpu_custom_call.1} parent=1 // loop_footer_branch
      %184 = sbr.rel target = $region27
    $region32: #{tpu_custom_call.1} parent=1 // loop_exit
      _
    %v2140 = vmax.f32 %v209, 0.0
    %v2141 = vld [vmem:[%s4] sm:$0xff]
    %v2142 = vld [vmem:[%s4 + $0x8] sm:$0x3]
    %v2143 = vld [vmem:[%s5] sm:$0x1]
    %v2145 = vperm.slane %v2143, 0
    %2148 = vrot.lane.b32.xlu0 %v2140, 108
    %v2149 = vpop.permute.xlu0 %2148
    %vm2150 = vcmask 80896
    %v2151 = vsel %vm2150, %v2149, 0
    %vm2153 = vcmask 1041408
    %v2155 = vsel %vm2153, %v2142, 0
    %2157 = vmatpush.msra.mxu0 0.0
    %2158 = vmatpush.msra.mxu0 0.0
    %2159 = vmatpush.msra.mxu0 0.0
    %2160 = vmatpush.msra.mxu0 0.0
    %2161 = vmatpush.msra.mxu0 0.0
    %2162 = vmatpush.msra.mxu0 0.0
    %2163 = vmatpush.msra.mxu0 0.0
    %2164 = vmatpush.msra.mxu0 0.0
    %2165 = vmatpush.msra.mxu0 0.0
    %2166 = vmatpush.msra.mxu0 0.0
    %2167 = vmatpush.msra.mxu0 0.0
    %2168 = vmatpush.msra.mxu0 0.0
    %2169 = vmatpush.msra.mxu0 0.0
    %2170 = vmatpush.msra.mxu0 0.0
    %2171 = vmatpush.msra.mxu0 %v2155
    %2172 = vmatpush.msra.mxu0 %v2141
    %2173 = vmatmul.f32.gmra.mxu0 %v2151
    %v2174 = vpop.f32.mrf.mxu0
    %v2175 = vadd.f32 %v2145, %v2174
    %2176 = vdwg.mxu0
    %v2177 = vxor.u32 %v2175, 2147483648
    %v2178 = vmul.f32 %v2177, 1.442695
    %v2179 = vpow.pop %v2178
    %v2180 = vadd.f32 %v2179, 1.0
    %v2181 = vrcp.pop %v2180
    %v2182 = vmul.f32 %v2180, %v2181
    %v2183 = vsub.f32 1.0, %v2182
    %v2184 = vmul.f32 %v2181, %v2183
    %v2185 = vadd.f32 %v2181, %v2184
    %vm2186 = vweird.f32 %v2180
    %vm2187 = vweird.f32 %v2181
    %vm2188 = vmor %vm2186, %vm2187
    %v2189 = vsel %vm2188, %v2181, %v2185
    %v2190 = vand.u32 2147483647, %v2180
    %vm2191 = vcmp.eq.f32.partialorder %v2190, 8.507059e+37
    %v2192 = vand.u32 %v2180, 2147483648
    %v2193 = vor.u32 1.1754944e-38, %v2192
    %v2194 = vsel %vm2191, %v2193, %v2189
    %v2195 = vmul.f32 1.0, %v2194
    %vm2196 = vcmask 9216
    %2197 = vst.msk [vmem:[#allocation2] sm:$0x3] %vm2196, %v2195
    // Predicated region
    $region33: #{tpu_custom_call.1} parent=1 // pred_check
      _
    $region34: #{tpu_custom_call.1} parent=1 // pred_check_branch
      %2199 = sbr.rel (0) target = $region36
    $region35: #{tpu_custom_call.1} parent=1 // pred_region
      %2201 = vsyncadd [#allocation3], 0
      %s2203 = sshll.u32 [#allocation2], 4
      %s2204 = int_to_ptr.vmem [resolvable:$true] %s2203
      %s2205 = sshll.u32 %s6, 4
      %s2206 = int_to_ptr.hbm [resolvable:$true] %s2205
      %2208 = dma.vmem_to_hbm [thread:$0]  %s2204, 32, %s2206, [#allocation3]
    $region36: #{tpu_custom_call.1} parent=1 // pred_fallthru
      _
    // Predicated region
    $region37: #{tpu_custom_call.1} parent=1 // pred_check
      _
    $region38: #{tpu_custom_call.1} parent=1 // pred_check_branch
      %2210 = sbr.rel (0) target = $region40
    $region39: #{tpu_custom_call.1} parent=1 // pred_region
      %2212 = dma.done [#allocation3], 32
    $region40: #{tpu_custom_call.1} parent=1 // pred_fallthru
      _
    %2213 = vsyncpa [#allocation3], 1

</llo_original>
